<compile_context>
chip_gen: v7x
topology: tpu7x:2x2x1
jax: 0.10.0
libtpu: 0.0.40
codegen_flags: <defaults>
</compile_context>

<pallas_src>
import jax
import jax.numpy as jnp
from jax.experimental import pallas as pl
from jax.experimental.pallas import tpu as pltpu


def _round_up(v, m):
    return (v + m - 1) // m * m


def _band3x3(w, W, stride):
    """w: (O, I, 3, 3) OIHW -> (3, W*I, Wout*O) bf16 block-banded weights.

    band[dy][wi*I + ci, wo*O + co] = w[co, ci, dy, dx]  with wi = stride*wo + dx - 1;
    taps falling outside [0, W) are dropped (== zero padding along width)."""
    O, I = int(w.shape[0]), int(w.shape[1])
    Wout = W if stride == 1 else W // 2
    bands = []
    for dy in range(3):
        B = jnp.zeros((W, I, Wout, O), jnp.float32)
        for dx in range(3):
            pairs = [(stride * wo + dx - 1, wo)
                     for wo in range(Wout) if 0 <= stride * wo + dx - 1 < W]
            if not pairs:
                continue
            src = jnp.array([p[0] for p in pairs], jnp.int32)
            dst = jnp.array([p[1] for p in pairs], jnp.int32)
            # advanced indices separated by ':' put the gathered dim in front:
            # indexed shape is (L, I, O); the (I, O) value broadcasts over L.
            B = B.at[src, :, dst, :].set(
                jnp.transpose(w[:, :, dy, dx]).astype(jnp.float32))
        bands.append(B.reshape(W * I, Wout * O))
    return jnp.stack(bands).astype(jnp.bfloat16)


def _band1x1_s2(wb, W):
    """wb: (O, I, 1, 1) -> (W*I, Wo*O) bf16 band for the 1x1 stride-2 bypass:
    band[(2*wo)*I + ci, wo*O + co] = wb[co, ci]."""
    O, I = int(wb.shape[0]), int(wb.shape[1])
    Wo = W // 2
    B = jnp.zeros((W, I, Wo, O), jnp.float32)
    src = jnp.array([2 * wo for wo in range(Wo)], jnp.int32)
    dst = jnp.arange(Wo, dtype=jnp.int32)
    B = B.at[src, :, dst, :].set(jnp.transpose(wb[:, :, 0, 0]).astype(jnp.float32))
    return B.reshape(W * I, Wo * O).astype(jnp.bfloat16)


def resblock_discriminator_gp(x, w1, w2, w3, wb):
    """x: (N, Cin, H, W) f32, weights in PyTorch OIHW layout.
    Returns (N, Cout, H//2, W//2) f32."""
    N, Cin, H, W = map(int, x.shape)
    Cout = int(w1.shape[0])
    assert H % 2 == 0 and W % 2 == 0, "even spatial dims expected"
    Ho, Wo = H // 2, W // 2

    # Images per grid step: as many as possible while (a) dividing N evenly and
    # (b) keeping >= 2 grid steps so both v7x TensorCores get work.
    Bimg = 1
    if N >= 2:
        for b in range(1, min(8, N // 2) + 1):
            if N % b == 0:
                Bimg = b
    n_steps = N // Bimg

    # Per-image row stride inside the padded scratch slab.  Interior image rows sit at
    # local rows [16, 16+H); the zero pad rows are local rows 15 and H+16.  S is a
    # multiple of 16 so every image's interior (and the bf16 packed tiles) stays aligned.
    S = _round_up(H + 17, 16)
    M1 = (Bimg - 1) * S + H            # rows fed to the stride-1 convs (incl. gaps)
    M2 = (Bimg - 1) * (S // 2) + Ho    # rows fed to the stride-2 conv / bypass

    # (N, Cin, H, W) -> (N, H, W*Cin): width*channels on the lane dim.
    # TODO(synk): the NCHW<->lane-major relayouts stay as thin XLA glue in the wrapper;
    # at realistic sizes they could be folded into the kernel to save one HBM round trip.
    xr = jnp.transpose(x, (0, 2, 3, 1)).reshape(N, H, W * Cin).astype(jnp.float32)

    w1b = _band3x3(w1, W, 1)          # (3, W*Cin,  W*Cout)
    w2b = _band3x3(w2, W, 1)          # (3, W*Cout, W*Cout)
    w3b = _band3x3(w3, W, 2)          # (3, W*Cout, Wo*Cout)
    wbb = _band1x1_s2(wb, W)          # (W*Cin, Wo*Cout)

    f32, bf16 = jnp.float32, jnp.bfloat16
    LX, LY, LO = W * Cin, W * Cout, Wo * Cout

    def kernel(x_ref, w1_ref, w2_ref, w3_ref, wb_ref, o_ref, xs, ys1, ys2):
        def lrelu(v):
            return jnp.where(v > 0, v, 0.2 * v)

        def conv(src_ref, wref, m, stride, cast):
            # 3 MXU dots, one per kernel row dy; accumulator initialised by dy=0.
            def rd(dy):
                if stride == 1:
                    a = src_ref[pl.ds(15 + dy, m), :]
                else:
                    a = src_ref[pl.ds(15 + dy, m, stride=2), :]
                return a.astype(bf16) if cast else a
            acc = jnp.dot(rd(0), wref[0], preferred_element_type=f32)
            acc = acc + jnp.dot(rd(1), wref[1], preferred_element_type=f32)
            acc = acc + jnp.dot(rd(2), wref[2], preferred_element_type=f32)
            return acc

        zx = jnp.zeros((1, LX), f32)
        zy16 = jnp.zeros((1, LY), bf16)
        zy32 = jnp.zeros((1, LY), f32)

        # Stage x into the row-padded slab.  Gap rows between images are never written;
        # they only feed accumulator rows that are never stored, so stale data is harmless.
        for b in range(Bimg):
            r0 = b * S
            xs[pl.ds(r0 + 15, 1), :] = zx
            xs[pl.ds(r0 + H + 16, 1), :] = zx
            xs[pl.ds(r0 + 16, H), :] = x_ref[b]

        # conv1 (3x3, s1, p1) + LeakyReLU(0.2) -> bf16 padded slab (single cast on store).
        y1 = lrelu(conv(xs, w1_ref, M1, 1, cast=True)).astype(bf16)
        for b in range(Bimg):
            r0 = b * S
            ys1[pl.ds(r0 + 15, 1), :] = zy16
            ys1[pl.ds(r0 + H + 16, 1), :] = zy16
            ys1[pl.ds(r0 + 16, H), :] = y1[b * S:b * S + H]

        # conv2 (3x3, s1, p1) + LeakyReLU(0.2) -> f32 padded slab (read with stride-2
        # sublane slices by conv3, so it stays on 32-bit rows).
        y2 = lrelu(conv(ys1, w2_ref, M1, 1, cast=False))
        for b in range(Bimg):
            r0 = b * S
            ys2[pl.ds(r0 + 15, 1), :] = zy32
            ys2[pl.ds(r0 + H + 16, 1), :] = zy32
            ys2[pl.ds(r0 + 16, H), :] = y2[b * S:b * S + H]

        # conv3 (3x3, s2, p1): only the Ho x Wo output lattice is computed.
        y3 = conv(ys2, w3_ref, M2, 2, cast=True)

        # 1x1 stride-2 bypass on the same lattice (image rows 0, 2, ...).
        xb = xs[pl.ds(16, M2, stride=2), :].astype(bf16)
        y3 = y3 + jnp.dot(xb, wb_ref[...], preferred_element_type=f32)

        for b in range(Bimg):
            o_ref[b] = y3[b * (S // 2):b * (S // 2) + Ho].astype(o_ref.dtype)

    out = pl.pallas_call(
        kernel,
        out_shape=jax.ShapeDtypeStruct((N, Ho, LO), jnp.float32),
        grid=(n_steps,),
        in_specs=[
            pl.BlockSpec((Bimg, H, LX), lambda g: (g, 0, 0)),
            # Constant index maps keep the banded weights VMEM-resident across steps.
            pl.BlockSpec((3, LX, LY), lambda g: (0, 0, 0)),
            pl.BlockSpec((3, LY, LY), lambda g: (0, 0, 0)),
            pl.BlockSpec((3, LY, LO), lambda g: (0, 0, 0)),
            pl.BlockSpec((LX, LO), lambda g: (0, 0)),
        ],
        out_specs=pl.BlockSpec((Bimg, Ho, LO), lambda g: (g, 0, 0)),
        scratch_shapes=[
            pltpu.VMEM((Bimg * S, LX), jnp.float32),    # row-padded x   (f32: stride-2 reads)
            pltpu.VMEM((Bimg * S, LY), jnp.bfloat16),   # row-padded y1  (bf16: stride-1 reads only)
            pltpu.VMEM((Bimg * S, LY), jnp.float32),    # row-padded y2  (f32: stride-2 reads)
        ],
        compiler_params=pltpu.CompilerParams(
            dimension_semantics=("parallel",),
            vmem_limit_bytes=32 * 1024 * 1024,
        ),
    )(xr, w1b, w2b, w3b, wbb)

    out = out.reshape(N, Ho, Wo, Cout)
    return jnp.transpose(out, (0, 3, 1, 2))          # back to NCHW


def _reference(x, w1, w2, w3, wb):
    def conv(v, w, stride, pad):
        return jax.lax.conv_general_dilated(
            v, w, window_strides=(stride, stride),
            padding=[(pad, pad), (pad, pad)],
            dimension_numbers=("NCHW", "OIHW", "NCHW"))
    lrelu = lambda v: jnp.where(v > 0, v, 0.2 * v)
    main = conv(lrelu(conv(lrelu(conv(x, w1, 1, 1)), w2, 1, 1)), w3, 2, 1)
    return main + conv(x, wb, 2, 0)


if __name__ == "__main__":
    key = jax.random.PRNGKey(0)
    kx, k1, k2, k3, kb = jax.random.split(key, 5)
    N, Cin, Cout, H, W = 2, 4, 8, 16, 16

    x = jax.random.normal(kx, (N, Cin, H, W), jnp.float32)
    w1 = 0.1 * jax.random.normal(k1, (Cout, Cin, 3, 3), jnp.float32)
    w2 = 0.1 * jax.random.normal(k2, (Cout, Cout, 3, 3), jnp.float32)
    w3 = 0.1 * jax.random.normal(k3, (Cout, Cout, 3, 3), jnp.float32)
    wb = 0.1 * jax.random.normal(kb, (Cout, Cin, 1, 1), jnp.float32)

    out = jax.jit(resblock_discriminator_gp)(x, w1, w2, w3, wb)
    out = jax.block_until_ready(out)

    ref = _reference(x, w1, w2, w3, wb)
    assert out.shape == (N, Cout, H // 2, W // 2), out.shape
    # bf16 MXU operands with f32 accumulation -> ~1e-2 worst-case abs error at these scales
    assert jnp.allclose(out, ref, atol=2e-2, rtol=2e-2), \
        float(jnp.max(jnp.abs(out - ref)))
    print("KERNEL_OK")
</pallas_src>

<mosaic_0001>
module attributes {stable_mosaic.version = 11 : i64} {
  func.func @kernel(%arg0: i32, %arg1: memref<1x16x64xf32, #tpu.memory_space<vmem>>, %arg2: memref<3x64x128xbf16, #tpu.memory_space<vmem>>, %arg3: memref<3x128x128xbf16, #tpu.memory_space<vmem>>, %arg4: memref<3x128x64xbf16, #tpu.memory_space<vmem>>, %arg5: memref<64x64xbf16, #tpu.memory_space<vmem>>, %arg6: memref<1x8x64xf32, #tpu.memory_space<vmem>>, %arg7: memref<48x64xf32, #tpu.memory_space<vmem>>, %arg8: memref<48x128xbf16, #tpu.memory_space<vmem>>, %arg9: memref<48x128xf32, #tpu.memory_space<vmem>>) attributes {dimension_semantics = [#tpu.dimension_semantics<parallel>], iteration_bounds = array<i64: 2>, scalar_prefetch = 0 : i64, scratch_operands = 3 : i64, tpu.core_type = #tpu.core_type<tc>, window_params = [{transform_indices = @transform_0, window_bounds = array<i64: 1, 16, 64>}, {pipeline_mode = #tpu.pipeline_mode<synchronous>, transform_indices = @transform_1, window_bounds = array<i64: 3, 64, 128>}, {pipeline_mode = #tpu.pipeline_mode<synchronous>, transform_indices = @transform_2, window_bounds = array<i64: 3, 128, 128>}, {pipeline_mode = #tpu.pipeline_mode<synchronous>, transform_indices = @transform_3, window_bounds = array<i64: 3, 128, 64>}, {pipeline_mode = #tpu.pipeline_mode<synchronous>, transform_indices = @transform_4, window_bounds = array<i64: 64, 64>}, {transform_indices = @transform_5, window_bounds = array<i64: 1, 8, 64>}]} {
    %cst = arith.constant 0.000000e+00 : f32
    %0 = vector.broadcast %cst : f32 to vector<1x64xf32>
    %cst_0 = arith.constant 0.000000e+00 : bf16
    %1 = vector.broadcast %cst_0 : bf16 to vector<1x128xbf16>
    %cst_1 = arith.constant 0.000000e+00 : f32
    %2 = vector.broadcast %cst_1 : f32 to vector<1x128xf32>
    %c15 = arith.constant 15 : index
    %c0 = arith.constant 0 : index
    %3 = vector.load %arg7[%c15, %c0] : memref<48x64xf32, #tpu.memory_space<vmem>>, vector<1x64xf32>
    tpu.vector_store %arg7[%c15, %c0], %0 {strides = array<i32>} : memref<48x64xf32, #tpu.memory_space<vmem>>, vector<1x64xf32>,
    %c32 = arith.constant 32 : index
    %c0_2 = arith.constant 0 : index
    %4 = vector.load %arg7[%c32, %c0_2] : memref<48x64xf32, #tpu.memory_space<vmem>>, vector<1x64xf32>
    tpu.vector_store %arg7[%c32, %c0_2], %0 {strides = array<i32>} : memref<48x64xf32, #tpu.memory_space<vmem>>, vector<1x64xf32>,
    %c0_3 = arith.constant 0 : index
    %c0_4 = arith.constant 0 : index
    %c0_5 = arith.constant 0 : index
    %5 = vector.load %arg1[%c0_3, %c0_4, %c0_5] : memref<1x16x64xf32, #tpu.memory_space<vmem>>, vector<1x16x64xf32>
    %6 = vector.shape_cast %5 : vector<1x16x64xf32> to vector<16x64xf32>
    %c16 = arith.constant 16 : index
    %c0_6 = arith.constant 0 : index
    %7 = vector.load %arg7[%c16, %c0_6] : memref<48x64xf32, #tpu.memory_space<vmem>>, vector<16x64xf32>
    tpu.vector_store %arg7[%c16, %c0_6], %6 {strides = array<i32>} : memref<48x64xf32, #tpu.memory_space<vmem>>, vector<16x64xf32>,
    %c15_7 = arith.constant 15 : index
    %c0_8 = arith.constant 0 : index
    %8 = vector.load %arg7[%c15_7, %c0_8] : memref<48x64xf32, #tpu.memory_space<vmem>>, vector<16x64xf32>
    %9 = arith.truncf %8 : vector<16x64xf32> to vector<16x64xbf16>
    %c0_9 = arith.constant 0 : index
    %c0_10 = arith.constant 0 : index
    %c0_11 = arith.constant 0 : index
    %10 = vector.load %arg2[%c0_9, %c0_10, %c0_11] : memref<3x64x128xbf16, #tpu.memory_space<vmem>>, vector<1x64x128xbf16>
    %11 = vector.shape_cast %10 : vector<1x64x128xbf16> to vector<64x128xbf16>
    %cst_12 = arith.constant dense<0.000000e+00> : vector<16x128xf32>
    %12 = tpu.matmul %9, %11, %cst_12 {dimension_numbers = #tpu.dot_dimension_numbers<[1], [0], [0], [1], [0, 0, 1, 1], [], []>} : vector<16x64xbf16>, vector<64x128xbf16>, vector<16x128xf32> -> vector<16x128xf32>
    %c16_13 = arith.constant 16 : index
    %c0_14 = arith.constant 0 : index
    %13 = vector.load %arg7[%c16_13, %c0_14] : memref<48x64xf32, #tpu.memory_space<vmem>>, vector<16x64xf32>
    %14 = arith.truncf %13 : vector<16x64xf32> to vector<16x64xbf16>
    %c1 = arith.constant 1 : index
    %c0_15 = arith.constant 0 : index
    %c0_16 = arith.constant 0 : index
    %15 = vector.load %arg2[%c1, %c0_15, %c0_16] : memref<3x64x128xbf16, #tpu.memory_space<vmem>>, vector<1x64x128xbf16>
    %16 = vector.shape_cast %15 : vector<1x64x128xbf16> to vector<64x128xbf16>
    %cst_17 = arith.constant dense<0.000000e+00> : vector<16x128xf32>
    %17 = tpu.matmul %14, %16, %cst_17 {dimension_numbers = #tpu.dot_dimension_numbers<[1], [0], [0], [1], [0, 0, 1, 1], [], []>} : vector<16x64xbf16>, vector<64x128xbf16>, vector<16x128xf32> -> vector<16x128xf32>
    %18 = arith.addf %12, %17 : vector<16x128xf32>
    %c17 = arith.constant 17 : index
    %c0_18 = arith.constant 0 : index
    %19 = vector.load %arg7[%c17, %c0_18] : memref<48x64xf32, #tpu.memory_space<vmem>>, vector<16x64xf32>
    %20 = arith.truncf %19 : vector<16x64xf32> to vector<16x64xbf16>
    %c2 = arith.constant 2 : index
    %c0_19 = arith.constant 0 : index
    %c0_20 = arith.constant 0 : index
    %21 = vector.load %arg2[%c2, %c0_19, %c0_20] : memref<3x64x128xbf16, #tpu.memory_space<vmem>>, vector<1x64x128xbf16>
    %22 = vector.shape_cast %21 : vector<1x64x128xbf16> to vector<64x128xbf16>
    %cst_21 = arith.constant dense<0.000000e+00> : vector<16x128xf32>
    %23 = tpu.matmul %20, %22, %cst_21 {dimension_numbers = #tpu.dot_dimension_numbers<[1], [0], [0], [1], [0, 0, 1, 1], [], []>} : vector<16x64xbf16>, vector<64x128xbf16>, vector<16x128xf32> -> vector<16x128xf32>
    %24 = arith.addf %18, %23 : vector<16x128xf32>
    %cst_22 = arith.constant 0.000000e+00 : f32
    %25 = vector.broadcast %cst_22 : f32 to vector<16x128xf32>
    %26 = arith.cmpf ogt, %24, %25 : vector<16x128xf32>
    %cst_23 = arith.constant 2.000000e-01 : f32
    %27 = vector.broadcast %cst_23 : f32 to vector<16x128xf32>
    %28 = arith.mulf %27, %24 : vector<16x128xf32>
    %29 = arith.select %26, %24, %28 : vector<16x128xi1>, vector<16x128xf32>
    %30 = arith.truncf %29 : vector<16x128xf32> to vector<16x128xbf16>
    %c15_24 = arith.constant 15 : index
    %c0_25 = arith.constant 0 : index
    %31 = vector.load %arg8[%c15_24, %c0_25] : memref<48x128xbf16, #tpu.memory_space<vmem>>, vector<1x128xbf16>
    tpu.vector_store %arg8[%c15_24, %c0_25], %1 {strides = array<i32>} : memref<48x128xbf16, #tpu.memory_space<vmem>>, vector<1x128xbf16>,
    %c32_26 = arith.constant 32 : index
    %c0_27 = arith.constant 0 : index
    %32 = vector.load %arg8[%c32_26, %c0_27] : memref<48x128xbf16, #tpu.memory_space<vmem>>, vector<1x128xbf16>
    tpu.vector_store %arg8[%c32_26, %c0_27], %1 {strides = array<i32>} : memref<48x128xbf16, #tpu.memory_space<vmem>>, vector<1x128xbf16>,
    %c16_28 = arith.constant 16 : index
    %c0_29 = arith.constant 0 : index
    %33 = vector.load %arg8[%c16_28, %c0_29] : memref<48x128xbf16, #tpu.memory_space<vmem>>, vector<16x128xbf16>
    tpu.vector_store %arg8[%c16_28, %c0_29], %30 {strides = array<i32>} : memref<48x128xbf16, #tpu.memory_space<vmem>>, vector<16x128xbf16>,
    %c15_30 = arith.constant 15 : index
    %c0_31 = arith.constant 0 : index
    %34 = vector.load %arg8[%c15_30, %c0_31] : memref<48x128xbf16, #tpu.memory_space<vmem>>, vector<16x128xbf16>
    %c0_32 = arith.constant 0 : index
    %c0_33 = arith.constant 0 : index
    %c0_34 = arith.constant 0 : index
    %35 = vector.load %arg3[%c0_32, %c0_33, %c0_34] : memref<3x128x128xbf16, #tpu.memory_space<vmem>>, vector<1x128x128xbf16>
    %36 = vector.shape_cast %35 : vector<1x128x128xbf16> to vector<128x128xbf16>
    %cst_35 = arith.constant dense<0.000000e+00> : vector<16x128xf32>
    %37 = tpu.matmul %34, %36, %cst_35 {dimension_numbers = #tpu.dot_dimension_numbers<[1], [0], [0], [1], [0, 0, 1, 1], [], []>} : vector<16x128xbf16>, vector<128x128xbf16>, vector<16x128xf32> -> vector<16x128xf32>
    %c16_36 = arith.constant 16 : index
    %c0_37 = arith.constant 0 : index
    %38 = vector.load %arg8[%c16_36, %c0_37] : memref<48x128xbf16, #tpu.memory_space<vmem>>, vector<16x128xbf16>
    %c1_38 = arith.constant 1 : index
    %c0_39 = arith.constant 0 : index
    %c0_40 = arith.constant 0 : index
    %39 = vector.load %arg3[%c1_38, %c0_39, %c0_40] : memref<3x128x128xbf16, #tpu.memory_space<vmem>>, vector<1x128x128xbf16>
    %40 = vector.shape_cast %39 : vector<1x128x128xbf16> to vector<128x128xbf16>
    %cst_41 = arith.constant dense<0.000000e+00> : vector<16x128xf32>
    %41 = tpu.matmul %38, %40, %cst_41 {dimension_numbers = #tpu.dot_dimension_numbers<[1], [0], [0], [1], [0, 0, 1, 1], [], []>} : vector<16x128xbf16>, vector<128x128xbf16>, vector<16x128xf32> -> vector<16x128xf32>
    %42 = arith.addf %37, %41 : vector<16x128xf32>
    %c17_42 = arith.constant 17 : index
    %c0_43 = arith.constant 0 : index
    %43 = vector.load %arg8[%c17_42, %c0_43] : memref<48x128xbf16, #tpu.memory_space<vmem>>, vector<16x128xbf16>
    %c2_44 = arith.constant 2 : index
    %c0_45 = arith.constant 0 : index
    %c0_46 = arith.constant 0 : index
    %44 = vector.load %arg3[%c2_44, %c0_45, %c0_46] : memref<3x128x128xbf16, #tpu.memory_space<vmem>>, vector<1x128x128xbf16>
    %45 = vector.shape_cast %44 : vector<1x128x128xbf16> to vector<128x128xbf16>
    %cst_47 = arith.constant dense<0.000000e+00> : vector<16x128xf32>
    %46 = tpu.matmul %43, %45, %cst_47 {dimension_numbers = #tpu.dot_dimension_numbers<[1], [0], [0], [1], [0, 0, 1, 1], [], []>} : vector<16x128xbf16>, vector<128x128xbf16>, vector<16x128xf32> -> vector<16x128xf32>
    %47 = arith.addf %42, %46 : vector<16x128xf32>
    %cst_48 = arith.constant 0.000000e+00 : f32
    %48 = vector.broadcast %cst_48 : f32 to vector<16x128xf32>
    %49 = arith.cmpf ogt, %47, %48 : vector<16x128xf32>
    %cst_49 = arith.constant 2.000000e-01 : f32
    %50 = vector.broadcast %cst_49 : f32 to vector<16x128xf32>
    %51 = arith.mulf %50, %47 : vector<16x128xf32>
    %52 = arith.select %49, %47, %51 : vector<16x128xi1>, vector<16x128xf32>
    %c15_50 = arith.constant 15 : index
    %c0_51 = arith.constant 0 : index
    %53 = vector.load %arg9[%c15_50, %c0_51] : memref<48x128xf32, #tpu.memory_space<vmem>>, vector<1x128xf32>
    tpu.vector_store %arg9[%c15_50, %c0_51], %2 {strides = array<i32>} : memref<48x128xf32, #tpu.memory_space<vmem>>, vector<1x128xf32>,
    %c32_52 = arith.constant 32 : index
    %c0_53 = arith.constant 0 : index
    %54 = vector.load %arg9[%c32_52, %c0_53] : memref<48x128xf32, #tpu.memory_space<vmem>>, vector<1x128xf32>
    tpu.vector_store %arg9[%c32_52, %c0_53], %2 {strides = array<i32>} : memref<48x128xf32, #tpu.memory_space<vmem>>, vector<1x128xf32>,
    %c16_54 = arith.constant 16 : index
    %c0_55 = arith.constant 0 : index
    %55 = vector.load %arg9[%c16_54, %c0_55] : memref<48x128xf32, #tpu.memory_space<vmem>>, vector<16x128xf32>
    tpu.vector_store %arg9[%c16_54, %c0_55], %52 {strides = array<i32>} : memref<48x128xf32, #tpu.memory_space<vmem>>, vector<16x128xf32>,
    %c15_56 = arith.constant 15 : index
    %c0_57 = arith.constant 0 : index
    %56 = tpu.strided_load %arg9[%c15_56, %c0_57] {strides = array<i32: 2, 1>} : memref<48x128xf32, #tpu.memory_space<vmem>>, vector<8x128xf32>
    %57 = arith.truncf %56 : vector<8x128xf32> to vector<8x128xbf16>
    %c0_58 = arith.constant 0 : index
    %c0_59 = arith.constant 0 : index
    %c0_60 = arith.constant 0 : index
    %58 = vector.load %arg4[%c0_58, %c0_59, %c0_60] : memref<3x128x64xbf16, #tpu.memory_space<vmem>>, vector<1x128x64xbf16>
    %59 = vector.shape_cast %58 : vector<1x128x64xbf16> to vector<128x64xbf16>
    %cst_61 = arith.constant dense<0.000000e+00> : vector<8x64xf32>
    %60 = tpu.matmul %57, %59, %cst_61 {dimension_numbers = #tpu.dot_dimension_numbers<[1], [0], [0], [1], [0, 0, 1, 1], [], []>} : vector<8x128xbf16>, vector<128x64xbf16>, vector<8x64xf32> -> vector<8x64xf32>
    %c16_62 = arith.constant 16 : index
    %c0_63 = arith.constant 0 : index
    %61 = tpu.strided_load %arg9[%c16_62, %c0_63] {strides = array<i32: 2, 1>} : memref<48x128xf32, #tpu.memory_space<vmem>>, vector<8x128xf32>
    %62 = arith.truncf %61 : vector<8x128xf32> to vector<8x128xbf16>
    %c1_64 = arith.constant 1 : index
    %c0_65 = arith.constant 0 : index
    %c0_66 = arith.constant 0 : index
    %63 = vector.load %arg4[%c1_64, %c0_65, %c0_66] : memref<3x128x64xbf16, #tpu.memory_space<vmem>>, vector<1x128x64xbf16>
    %64 = vector.shape_cast %63 : vector<1x128x64xbf16> to vector<128x64xbf16>
    %cst_67 = arith.constant dense<0.000000e+00> : vector<8x64xf32>
    %65 = tpu.matmul %62, %64, %cst_67 {dimension_numbers = #tpu.dot_dimension_numbers<[1], [0], [0], [1], [0, 0, 1, 1], [], []>} : vector<8x128xbf16>, vector<128x64xbf16>, vector<8x64xf32> -> vector<8x64xf32>
    %66 = arith.addf %60, %65 : vector<8x64xf32>
    %c17_68 = arith.constant 17 : index
    %c0_69 = arith.constant 0 : index
    %67 = tpu.strided_load %arg9[%c17_68, %c0_69] {strides = array<i32: 2, 1>} : memref<48x128xf32, #tpu.memory_space<vmem>>, vector<8x128xf32>
    %68 = arith.truncf %67 : vector<8x128xf32> to vector<8x128xbf16>
    %c2_70 = arith.constant 2 : index
    %c0_71 = arith.constant 0 : index
    %c0_72 = arith.constant 0 : index
    %69 = vector.load %arg4[%c2_70, %c0_71, %c0_72] : memref<3x128x64xbf16, #tpu.memory_space<vmem>>, vector<1x128x64xbf16>
    %70 = vector.shape_cast %69 : vector<1x128x64xbf16> to vector<128x64xbf16>
    %cst_73 = arith.constant dense<0.000000e+00> : vector<8x64xf32>
    %71 = tpu.matmul %68, %70, %cst_73 {dimension_numbers = #tpu.dot_dimension_numbers<[1], [0], [0], [1], [0, 0, 1, 1], [], []>} : vector<8x128xbf16>, vector<128x64xbf16>, vector<8x64xf32> -> vector<8x64xf32>
    %72 = arith.addf %66, %71 : vector<8x64xf32>
    %c16_74 = arith.constant 16 : index
    %c0_75 = arith.constant 0 : index
    %73 = tpu.strided_load %arg7[%c16_74, %c0_75] {strides = array<i32: 2, 1>} : memref<48x64xf32, #tpu.memory_space<vmem>>, vector<8x64xf32>
    %74 = arith.truncf %73 : vector<8x64xf32> to vector<8x64xbf16>
    %c0_76 = arith.constant 0 : index
    %c0_77 = arith.constant 0 : index
    %75 = vector.load %arg5[%c0_76, %c0_77] : memref<64x64xbf16, #tpu.memory_space<vmem>>, vector<64x64xbf16>
    %cst_78 = arith.constant dense<0.000000e+00> : vector<8x64xf32>
    %76 = tpu.matmul %74, %75, %cst_78 {dimension_numbers = #tpu.dot_dimension_numbers<[1], [0], [0], [1], [0, 0, 1, 1], [], []>} : vector<8x64xbf16>, vector<64x64xbf16>, vector<8x64xf32> -> vector<8x64xf32>
    %77 = arith.addf %72, %76 : vector<8x64xf32>
    %c0_79 = arith.constant 0 : index
    %c0_80 = arith.constant 0 : index
    %c0_81 = arith.constant 0 : index
    %78 = vector.load %arg6[%c0_79, %c0_80, %c0_81] : memref<1x8x64xf32, #tpu.memory_space<vmem>>, vector<1x8x64xf32>
    %79 = vector.shape_cast %78 : vector<1x8x64xf32> to vector<8x64xf32>
    %80 = vector.shape_cast %77 : vector<8x64xf32> to vector<1x8x64xf32>
    tpu.vector_store %arg6[%c0_79, %c0_80, %c0_81], %80 {strides = array<i32>} : memref<1x8x64xf32, #tpu.memory_space<vmem>>, vector<1x8x64xf32>,
    return
  }
  func.func @transform_0(%arg0: i32) -> (i32, i32, i32) {
    %c0_i32 = arith.constant 0 : i32
    %c0_i32_0 = arith.constant 0 : i32
    %c0_i32_1 = arith.constant 0 : i32
    return %arg0, %c0_i32, %c0_i32_0 : i32, i32, i32
  }
  func.func @transform_1(%arg0: i32) -> (i32, i32, i32) {
    %c0_i32 = arith.constant 0 : i32
    %c0_i32_0 = arith.constant 0 : i32
    %c0_i32_1 = arith.constant 0 : i32
    %c0_i32_2 = arith.constant 0 : i32
    return %c0_i32, %c0_i32_0, %c0_i32_1 : i32, i32, i32
  }
  func.func @transform_2(%arg0: i32) -> (i32, i32, i32) {
    %c0_i32 = arith.constant 0 : i32
    %c0_i32_0 = arith.constant 0 : i32
    %c0_i32_1 = arith.constant 0 : i32
    %c0_i32_2 = arith.constant 0 : i32
    return %c0_i32, %c0_i32_0, %c0_i32_1 : i32, i32, i32
  }
  func.func @transform_3(%arg0: i32) -> (i32, i32, i32) {
    %c0_i32 = arith.constant 0 : i32
    %c0_i32_0 = arith.constant 0 : i32
    %c0_i32_1 = arith.constant 0 : i32
    %c0_i32_2 = arith.constant 0 : i32
    return %c0_i32, %c0_i32_0, %c0_i32_1 : i32, i32, i32
  }
  func.func @transform_4(%arg0: i32) -> (i32, i32) {
    %c0_i32 = arith.constant 0 : i32
    %c0_i32_0 = arith.constant 0 : i32
    %c0_i32_1 = arith.constant 0 : i32
    return %c0_i32, %c0_i32_0 : i32, i32
  }
  func.func @transform_5(%arg0: i32) -> (i32, i32, i32) {
    %c0_i32 = arith.constant 0 : i32
    %c0_i32_0 = arith.constant 0 : i32
    %c0_i32_1 = arith.constant 0 : i32
    return %arg0, %c0_i32, %c0_i32_0 : i32, i32, i32
  }
}

</mosaic_0001>

<llo_original>
// kernel: resblock_discriminator_gp.1
$region0: #{resblock_discriminator_gp.1}
  #allocation0 [shape = 'u32[]', space=smem, size = 0x4, offset = 0x4, fixed_abs, tag = 'smem constant byte address 0x4 - core index']
  #allocation1 [shape = 'u32[144,128]{1,0:T(1,128)}', space=vmem, size = 0x12000, scoped, tag = 'internal scratch']
  #allocation2 [shape = 'f32[48,64]{1,0:T(8,128)}', space=vmem, size = 0x6000, scoped, tag = 'scratch operand']
  #allocation3 [shape = 'bf16[48,128]{1,0:T(16,128)(2,1)}', space=vmem, size = 0x3000, scoped, tag = 'scratch operand']
  #allocation4 [shape = 'f32[48,128]{1,0:T(8,128)}', space=vmem, size = 0x6000, scoped, tag = 'scratch operand']
  %s0 = inlined_call_operand.vmem [shape: f32[2,16,64], index: 0, kind: input, shape index: {}]
  %s1 = inlined_call_operand.vmem [shape: bf16[3,64,128], index: 1, kind: input, shape index: {}]
  %s2 = inlined_call_operand.vmem [shape: bf16[3,128,128], index: 2, kind: input, shape index: {}]
  %s3 = inlined_call_operand.vmem [shape: bf16[3,128,64], index: 3, kind: input, shape index: {}]
  %s4 = inlined_call_operand.vmem [shape: bf16[64,64], index: 4, kind: input, shape index: {}]
  %s5 = inlined_call_operand.vmem [shape: f32[2,8,64], index: 5, kind: output, shape index: {}]
  %s6 = sld [smem:[#allocation0]]
  $region53: #{resblock_discriminator_gp.1} parent=0
    _
  %s8 = ssub.s32 1, %s6
  %s9 = scalar_select 0, %s8, %s6
  loop: start=0, step=1, limit=4
  $region2: #{resblock_discriminator_gp.1} parent=0 // loop_pre_header
    _
  $region3: #{resblock_discriminator_gp.1} parent=0 // loop_header
    %s11 = sphi 0, %s15
    %p12 = scmp.ge.s32.totalorder %s11, 4
    %s21 = sphi 0, %s23
    %s24 = sphi 0, %s21
    %s25 = sphi 0, %s24
    %s41 = sphi 0, %s25
    %s45 = sphi 0, %s45
    %s47 = sphi 0, %s45
    %s48 = sphi 0, %s47
    %s62 = sphi 0, %s48
    %s66 = sphi 0, %s66
    %s68 = sphi 0, %s66
    %s69 = sphi 0, %s68
    %s83 = sphi 0, %s69
    %s87 = sphi 0, %s87
    %s89 = sphi 0, %s87
    %s90 = sphi 0, %s89
    %s104 = sphi 0, %s90
    %s108 = sphi 0, %s108
    %s110 = sphi 0, %s108
    %s111 = sphi 0, %s110
    %s125 = sphi 0, %s111
    %s131 = sphi 0, %s133
    %s134 = sphi 0, %s131
    %s135 = sphi 0, %s134
    %s151 = sphi 0, %s135
  $region4: #{resblock_discriminator_gp.1} parent=0 // loop_header_branch
    %14 = sbr.rel (%p12) target = $region8
  $region5: #{resblock_discriminator_gp.1} parent=0 // loop_body
    %s16 = ssub.s32 %s11, 1
    %s17 = ssub.s32 %s11, 2
    %s18 = sadd.s32 %s11, 1
    %s19 = ssub.s32 %s11, %s18
    %p20 = scmp.eq.s32.totalorder %s19, 0
    %s22 = sadd.s32 %s21, 1
    %s23 = scalar_select %p20, %s21, %s22
    %p26 = pneg %p20
    %p27 = scmp.eq.s32.totalorder %s11, 1
    %p28 = por %p26, %p27
    %p29 = scmp.ne.s32.totalorder %s21, %s24
    %p30 = scmp.eq.s32.totalorder %s11, 0
    %p31 = por %p29, %p30
    %p32 = scmp.ne.s32.totalorder %s21, %s24
    %p33 = scmp.eq.s32.totalorder %s16, 1
    %p34 = por %p32, %p33
    %p35 = scmp.ne.s32.totalorder %s24, %s25
    %p36 = scmp.eq.s32.totalorder %s16, 0
    %p37 = por %p35, %p36
    %p38 = scmp.ne.s32.totalorder %s24, %s25
    %p39 = scmp.eq.s32.totalorder %s17, 1
    %p40 = por %p38, %p39
    %p42 = scmp.ne.s32.totalorder %s25, %s41
    %p43 = scmp.eq.s32.totalorder %s17, 0
    %p44 = por %p42, %p43
    %s46 = sadd.s32 %s45, 1
    %p49 = scmp.eq.s32.totalorder %s11, 1
    %p50 = scmp.ne.s32.totalorder %s45, %s47
    %p51 = scmp.eq.s32.totalorder %s11, 0
    %p52 = por %p50, %p51
    %p53 = scmp.ne.s32.totalorder %s45, %s47
    %p54 = scmp.eq.s32.totalorder %s16, 1
    %p55 = por %p53, %p54
    %p56 = scmp.ne.s32.totalorder %s47, %s48
    %p57 = scmp.eq.s32.totalorder %s16, 0
    %p58 = por %p56, %p57
    %p59 = scmp.ne.s32.totalorder %s47, %s48
    %p60 = scmp.eq.s32.totalorder %s17, 1
    %p61 = por %p59, %p60
    %p63 = scmp.ne.s32.totalorder %s48, %s62
    %p64 = scmp.eq.s32.totalorder %s17, 0
    %p65 = por %p63, %p64
    %s67 = sadd.s32 %s66, 1
    %p70 = scmp.eq.s32.totalorder %s11, 1
    %p71 = scmp.ne.s32.totalorder %s66, %s68
    %p72 = scmp.eq.s32.totalorder %s11, 0
    %p73 = por %p71, %p72
    %p74 = scmp.ne.s32.totalorder %s66, %s68
    %p75 = scmp.eq.s32.totalorder %s16, 1
    %p76 = por %p74, %p75
    %p77 = scmp.ne.s32.totalorder %s68, %s69
    %p78 = scmp.eq.s32.totalorder %s16, 0
    %p79 = por %p77, %p78
    %p80 = scmp.ne.s32.totalorder %s68, %s69
    %p81 = scmp.eq.s32.totalorder %s17, 1
    %p82 = por %p80, %p81
    %p84 = scmp.ne.s32.totalorder %s69, %s83
    %p85 = scmp.eq.s32.totalorder %s17, 0
    %p86 = por %p84, %p85
    %s88 = sadd.s32 %s87, 1
    %p91 = scmp.eq.s32.totalorder %s11, 1
    %p92 = scmp.ne.s32.totalorder %s87, %s89
    %p93 = scmp.eq.s32.totalorder %s11, 0
    %p94 = por %p92, %p93
    %p95 = scmp.ne.s32.totalorder %s87, %s89
    %p96 = scmp.eq.s32.totalorder %s16, 1
    %p97 = por %p95, %p96
    %p98 = scmp.ne.s32.totalorder %s89, %s90
    %p99 = scmp.eq.s32.totalorder %s16, 0
    %p100 = por %p98, %p99
    %p101 = scmp.ne.s32.totalorder %s89, %s90
    %p102 = scmp.eq.s32.totalorder %s17, 1
    %p103 = por %p101, %p102
    %p105 = scmp.ne.s32.totalorder %s90, %s104
    %p106 = scmp.eq.s32.totalorder %s17, 0
    %p107 = por %p105, %p106
    %s109 = sadd.s32 %s108, 1
    %p112 = scmp.eq.s32.totalorder %s11, 1
    %p113 = scmp.ne.s32.totalorder %s108, %s110
    %p114 = scmp.eq.s32.totalorder %s11, 0
    %p115 = por %p113, %p114
    %p116 = scmp.ne.s32.totalorder %s108, %s110
    %p117 = scmp.eq.s32.totalorder %s16, 1
    %p118 = por %p116, %p117
    %p119 = scmp.ne.s32.totalorder %s110, %s111
    %p120 = scmp.eq.s32.totalorder %s16, 0
    %p121 = por %p119, %p120
    %p122 = scmp.ne.s32.totalorder %s110, %s111
    %p123 = scmp.eq.s32.totalorder %s17, 1
    %p124 = por %p122, %p123
    %p126 = scmp.ne.s32.totalorder %s111, %s125
    %p127 = scmp.eq.s32.totalorder %s17, 0
    %p128 = por %p126, %p127
    %s129 = ssub.s32 %s11, %s18
    %p130 = scmp.eq.s32.totalorder %s129, 0
    %s132 = sadd.s32 %s131, 1
    %s133 = scalar_select %p130, %s131, %s132
    %p136 = pneg %p130
    %p137 = scmp.eq.s32.totalorder %s11, 1
    %p138 = por %p136, %p137
    %p139 = scmp.ne.s32.totalorder %s131, %s134
    %p140 = scmp.eq.s32.totalorder %s11, 0
    %p141 = por %p139, %p140
    %p142 = scmp.ne.s32.totalorder %s131, %s134
    %p143 = scmp.eq.s32.totalorder %s16, 1
    %p144 = por %p142, %p143
    %p145 = scmp.ne.s32.totalorder %s134, %s135
    %p146 = scmp.eq.s32.totalorder %s16, 0
    %p147 = por %p145, %p146
    %p148 = scmp.ne.s32.totalorder %s134, %s135
    %p149 = scmp.eq.s32.totalorder %s17, 1
    %p150 = por %p148, %p149
    %p152 = scmp.ne.s32.totalorder %s135, %s151
    %p153 = scmp.eq.s32.totalorder %s17, 0
    %p154 = por %p152, %p153
    %p155 = scmp.le.s32.totalorder 1, %s11
    %p156 = scmp.lt.s32.totalorder %s11, 3
    %p157 = pnand %p155, %p156
    %p158 = pneg %p157
    // Predicated region
    $region9: #{resblock_discriminator_gp.1} parent=5 // pred_check
      _
    $region10: #{resblock_discriminator_gp.1} parent=5 // pred_check_branch
      %160 = sbr.rel (%p157) target = $region12
    $region11: #{resblock_discriminator_gp.1} parent=5 // pred_region
      %s161 = ssub.s32 %s11, 1
      // Predicated region
      $region13: #{resblock_discriminator_gp.1} parent=11 // pred_check
        %p162 = pneg %p58
      $region14: #{resblock_discriminator_gp.1} parent=11 // pred_check_branch
        %164 = sbr.rel (%p162) target = $region16
      $region15: #{resblock_discriminator_gp.1} parent=11 // pred_region
        _
      $region16: #{resblock_discriminator_gp.1} parent=11 // pred_fallthru
        _
      // Predicated region
      $region17: #{resblock_discriminator_gp.1} parent=11 // pred_check
        %p165 = pneg %p79
      $region18: #{resblock_discriminator_gp.1} parent=11 // pred_check_branch
        %167 = sbr.rel (%p165) target = $region20
      $region19: #{resblock_discriminator_gp.1} parent=11 // pred_region
        _
      $region20: #{resblock_discriminator_gp.1} parent=11 // pred_fallthru
        _
      // Predicated region
      $region21: #{resblock_discriminator_gp.1} parent=11 // pred_check
        %p168 = pneg %p100
      $region22: #{resblock_discriminator_gp.1} parent=11 // pred_check_branch
        %170 = sbr.rel (%p168) target = $region24
      $region23: #{resblock_discriminator_gp.1} parent=11 // pred_region
        _
      $region24: #{resblock_discriminator_gp.1} parent=11 // pred_fallthru
        _
      // Predicated region
      $region25: #{resblock_discriminator_gp.1} parent=11 // pred_check
        %p171 = pneg %p121
      $region26: #{resblock_discriminator_gp.1} parent=11 // pred_check_branch
        %173 = sbr.rel (%p171) target = $region28
      $region27: #{resblock_discriminator_gp.1} parent=11 // pred_region
        _
      $region28: #{resblock_discriminator_gp.1} parent=11 // pred_fallthru
        _
    $region12: #{resblock_discriminator_gp.1} parent=5 // pred_fallthru
      _
    %p174 = scmp.lt.s32.totalorder %s11, 2
    // Predicated region
    $region29: #{resblock_discriminator_gp.1} parent=5 // pred_check
      %p175 = pneg %p174
    $region30: #{resblock_discriminator_gp.1} parent=5 // pred_check_branch
      %177 = sbr.rel (%p175) target = $region32
    $region31: #{resblock_discriminator_gp.1} parent=5 // pred_region
      // Predicated region
      $region33: #{resblock_discriminator_gp.1} parent=31 // pred_check
        %p178 = pneg %p31
      $region34: #{resblock_discriminator_gp.1} parent=31 // pred_check_branch
        %180 = sbr.rel (%p178) target = $region36
      $region35: #{resblock_discriminator_gp.1} parent=31 // pred_region
        %p181 = scmp.lt.s32.totalorder %s11, 1
        %s182 = scalar_select %p181, %s11, 1
        %s183 = smul.addr %s182, 2
        %s184 = smul.addr %s183, 8
        %s185 = scalar_lea.vmem %s0, %s184
      $region36: #{resblock_discriminator_gp.1} parent=31 // pred_fallthru
        _
    $region32: #{resblock_discriminator_gp.1} parent=5 // pred_fallthru
      _
    %p186 = scmp.le.s32.totalorder 1, %s11
    %p187 = scmp.lt.s32.totalorder %s11, 3
    %p188 = pnand %p186, %p187
    %p189 = pneg %p188
    // Predicated region
    $region37: #{resblock_discriminator_gp.1} parent=5 // pred_check
      _
    $region38: #{resblock_discriminator_gp.1} parent=5 // pred_check_branch
      %191 = sbr.rel (%p188) target = $region40
    $region39: #{resblock_discriminator_gp.1} parent=5 // pred_region
      %s192 = ssub.s32 %s11, 1
      %p193 = scmp.lt.s32.totalorder %s16, 1
      %s194 = scalar_select %p193, %s16, 1
      %s195 = smul.addr %s194, 2
      %s196 = smul.addr %s195, 8
      %s197 = scalar_lea.vmem %s0, %s196
      %p198 = pneg %p37
      %p199 = pneg %p34
      %p200 = pneg %p58
      %p201 = pneg %p55
      %p202 = pneg %p79
      %p203 = pneg %p76
      %p204 = pneg %p100
      %p205 = pneg %p97
      %p206 = pneg %p121
      %p207 = pneg %p118
      %p208 = pneg %p147
      %p209 = pneg %p144
      %p210 = scmp.lt.s32.totalorder %s16, 1
      %s211 = scalar_select %p210, %s16, 1
      %s212 = smul.addr %s211, 8
      %s213 = scalar_lea.vmem %s5, %s212
      %p214 = scmp.lt.s32.totalorder %s16, 1
      %s215 = scalar_select %p214, %s16, 1
      %s216 = smul.addr %s215, 2
      %s217 = smul.addr %s216, 8
      %s218 = scalar_lea.vmem %s0, %s217
      %p219 = scmp.lt.s32.totalorder %s16, 1
      %s220 = scalar_select %p219, %s16, 1
      %s221 = smul.addr %s220, 8
      %s222 = scalar_lea.vmem %s5, %s221
      %vm224 = vcmask 516096
      %225 = vst.msk [vmem:[#allocation2 + $0xf] sm:$0x1] %vm224, 0.0
      %226 = vst.msk [vmem:[#allocation2 + $0x20] sm:$0x1] %vm224, 0.0
      %v227 = vld [vmem:[%s218] sm:$0xff]
      %v228 = vld [vmem:[%s218 + $0x8] sm:$0xff]
      %vm229 = vcmask 523264
      %230 = vst.msk [vmem:[#allocation2 + $0x10] sm:$0xff] %vm229, %v227
      %231 = vst.msk [vmem:[#allocation2 + $0x18] sm:$0xff] %vm229, %v228
      %v232 = vld [vmem:[#allocation2 + $0xf] sm:$0xff]
      %v233 = vld [vmem:[#allocation2 + $0x17] sm:$0xff]
      %v234 = vpack.c.bf16 %v233, %v232
      %v235 = vld [vmem:[%s1] sm:$0xf]
      %v236 = vld [vmem:[%s1 + $0x4] sm:$0xf]
      %v237 = vld [vmem:[%s1 + $0x8] sm:$0xf]
      %v238 = vld [vmem:[%s1 + $0xc] sm:$0xf]
      %v239 = vld [vmem:[%s1 + $0x10] sm:$0xf]
      %v240 = vld [vmem:[%s1 + $0x14] sm:$0xf]
      %v241 = vld [vmem:[%s1 + $0x18] sm:$0xf]
      %v242 = vld [vmem:[%s1 + $0x1c] sm:$0xf]
      %v243 = vld [vmem:[#allocation2 + $0x10] sm:$0xff]
      %v244 = vld [vmem:[#allocation2 + $0x18] sm:$0xff]
      %v245 = vpack.c.bf16 %v244, %v243
      %s246 = scalar_lea.vmem %s1, 32
      %v247 = vld [vmem:[%s246] sm:$0xf]
      %v248 = vld [vmem:[%s246 + $0x4] sm:$0xf]
      %v249 = vld [vmem:[%s246 + $0x8] sm:$0xf]
      %v250 = vld [vmem:[%s246 + $0xc] sm:$0xf]
      %v251 = vld [vmem:[%s246 + $0x10] sm:$0xf]
      %v252 = vld [vmem:[%s246 + $0x14] sm:$0xf]
      %v253 = vld [vmem:[%s246 + $0x18] sm:$0xf]
      %v254 = vld [vmem:[%s246 + $0x1c] sm:$0xf]
      %v263 = vunpack.c.l.b16 %v247
      %v264 = vunpack.c.l.b16 %v248
      %v265 = vunpack.c.l.b16 %v249
      %v266 = vunpack.c.l.b16 %v250
      %v267 = vunpack.c.l.b16 %v251
      %v268 = vunpack.c.l.b16 %v252
      %v269 = vunpack.c.l.b16 %v253
      %v270 = vunpack.c.l.b16 %v254
      %v271 = vpack.c.b16 %v264, %v263
      %v272 = vpack.c.b16 %v266, %v265
      %v273 = vpack.c.b16 %v268, %v267
      %v274 = vpack.c.b16 %v270, %v269
      %v280 = vsel %vm229, %v245, 0
      %282 = vmatprep.subr.bf16.mxu0 0
      %283 = vmatpush1.bf16.msra.mxu0 %v271
      %284 = vmatprep.subr.bf16.mxu0 0
      %285 = vmatpush1.bf16.msra.mxu0 %v272
      %286 = vmatprep.subr.bf16.mxu0 0
      %287 = vmatpush1.bf16.msra.mxu0 %v273
      %288 = vmatprep.subr.bf16.mxu0 0
      %289 = vmatpush1.bf16.msra.mxu0 %v274
      %290 = vmatprep.subr.bf16.mxu0 0
      %291 = vmatpush1.bf16.msra.mxu0 0
      %292 = vmatprep.subr.bf16.mxu0 0
      %293 = vmatpush1.bf16.msra.mxu0 0
      %294 = vmatprep.subr.bf16.mxu0 0
      %295 = vmatpush1.bf16.msra.mxu0 0
      %296 = vmatprep.subr.bf16.mxu0 0
      %297 = vmatpush1.bf16.msra.mxu0 0
      %298 = vmatprep.subr.bf16.mxu0 0
      %299 = vmatpush1.bf16.msra.mxu0 0
      %300 = vmatprep.subr.bf16.mxu0 0
      %301 = vmatpush1.bf16.msra.mxu0 0
      %302 = vmatprep.subr.bf16.mxu0 0
      %303 = vmatpush1.bf16.msra.mxu0 0
      %304 = vmatprep.subr.bf16.mxu0 0
      %305 = vmatpush1.bf16.msra.mxu0 0
      %306 = vmatprep.subr.bf16.mxu0 0
      %307 = vmatpush1.bf16.msra.mxu0 0
      %308 = vmatprep.subr.bf16.mxu0 0
      %309 = vmatpush1.bf16.msra.mxu0 0
      %310 = vmatprep.subr.bf16.mxu0 0
      %311 = vmatpush1.bf16.msra.mxu0 0
      %312 = vmatprep.subr.bf16.mxu0 0
      %313 = vmatpush1.bf16.msra.mxu0 0
      %314 = vmatprep.mubr.bf16.mxu0 0
      %315 = vmatmul.mubr.bf16.gmra.mrb[0].mxu0 %v280
      %v316 = vpop.f32.mrb[0].mxu0
      %v317 = vadd.f32 0.0, %v316
      %v318 = vpop.f32.mrb[0].mxu0
      %v319 = vpop.f32.mrb[0].mxu0
      %v320 = vadd.f32 0.0, %v319
      %v321 = vpop.f32.mrb[0].mxu0
      %322 = vdwg.mxu0
      %v331 = vunpack.c.l.b16 %v235
      %v332 = vunpack.c.l.b16 %v236
      %v333 = vunpack.c.l.b16 %v237
      %v334 = vunpack.c.l.b16 %v238
      %v335 = vunpack.c.l.b16 %v239
      %v336 = vunpack.c.l.b16 %v240
      %v337 = vunpack.c.l.b16 %v241
      %v338 = vunpack.c.l.b16 %v242
      %v339 = vpack.c.b16 %v332, %v331
      %v340 = vpack.c.b16 %v334, %v333
      %v341 = vpack.c.b16 %v336, %v335
      %v342 = vpack.c.b16 %v338, %v337
      %v348 = vsel %vm229, %v234, 0
      %350 = vmatprep.subr.bf16.mxu0 0
      %351 = vmatpush1.bf16.msra.mxu0 %v339
      %352 = vmatprep.subr.bf16.mxu0 0
      %353 = vmatpush1.bf16.msra.mxu0 %v340
      %354 = vmatprep.subr.bf16.mxu0 0
      %355 = vmatpush1.bf16.msra.mxu0 %v341
      %356 = vmatprep.subr.bf16.mxu0 0
      %357 = vmatpush1.bf16.msra.mxu0 %v342
      %358 = vmatprep.subr.bf16.mxu0 0
      %359 = vmatpush1.bf16.msra.mxu0 0
      %360 = vmatprep.subr.bf16.mxu0 0
      %361 = vmatpush1.bf16.msra.mxu0 0
      %362 = vmatprep.subr.bf16.mxu0 0
      %363 = vmatpush1.bf16.msra.mxu0 0
      %364 = vmatprep.subr.bf16.mxu0 0
      %365 = vmatpush1.bf16.msra.mxu0 0
      %366 = vmatprep.subr.bf16.mxu0 0
      %367 = vmatpush1.bf16.msra.mxu0 0
      %368 = vmatprep.subr.bf16.mxu0 0
      %369 = vmatpush1.bf16.msra.mxu0 0
      %370 = vmatprep.subr.bf16.mxu0 0
      %371 = vmatpush1.bf16.msra.mxu0 0
      %372 = vmatprep.subr.bf16.mxu0 0
      %373 = vmatpush1.bf16.msra.mxu0 0
      %374 = vmatprep.subr.bf16.mxu0 0
      %375 = vmatpush1.bf16.msra.mxu0 0
      %376 = vmatprep.subr.bf16.mxu0 0
      %377 = vmatpush1.bf16.msra.mxu0 0
      %378 = vmatprep.subr.bf16.mxu0 0
      %379 = vmatpush1.bf16.msra.mxu0 0
      %380 = vmatprep.subr.bf16.mxu0 0
      %381 = vmatpush1.bf16.msra.mxu0 0
      %382 = vmatprep.mubr.bf16.mxu0 0
      %383 = vmatmul.mubr.bf16.gmra.mrb[0].mxu0 %v348
      %v384 = vpop.f32.mrb[0].mxu0
      %v385 = vadd.f32 %v317, %v384
      %v386 = vpop.f32.mrb[0].mxu0
      %v387 = vpop.f32.mrb[0].mxu0
      %v388 = vadd.f32 %v320, %v387
      %v389 = vpop.f32.mrb[0].mxu0
      %390 = vdwg.mxu0
      %v391 = vld [vmem:[#allocation2 + $0x11] sm:$0xff]
      %v392 = vld [vmem:[#allocation2 + $0x19] sm:$0xff]
      %v393 = vpack.c.bf16 %v392, %v391
      %s394 = scalar_lea.vmem %s1, 64
      %v395 = vld [vmem:[%s394] sm:$0xf]
      %v396 = vld [vmem:[%s394 + $0x4] sm:$0xf]
      %v397 = vld [vmem:[%s394 + $0x8] sm:$0xf]
      %v398 = vld [vmem:[%s394 + $0xc] sm:$0xf]
      %v399 = vld [vmem:[%s394 + $0x10] sm:$0xf]
      %v400 = vld [vmem:[%s394 + $0x14] sm:$0xf]
      %v401 = vld [vmem:[%s394 + $0x18] sm:$0xf]
      %v402 = vld [vmem:[%s394 + $0x1c] sm:$0xf]
      %v411 = vunpack.c.l.b16 %v395
      %v412 = vunpack.c.l.b16 %v396
      %v413 = vunpack.c.l.b16 %v397
      %v414 = vunpack.c.l.b16 %v398
      %v415 = vunpack.c.l.b16 %v399
      %v416 = vunpack.c.l.b16 %v400
      %v417 = vunpack.c.l.b16 %v401
      %v418 = vunpack.c.l.b16 %v402
      %v419 = vpack.c.b16 %v412, %v411
      %v420 = vpack.c.b16 %v414, %v413
      %v421 = vpack.c.b16 %v416, %v415
      %v422 = vpack.c.b16 %v418, %v417
      %v428 = vsel %vm229, %v393, 0
      %430 = vmatprep.subr.bf16.mxu0 0
      %431 = vmatpush1.bf16.msra.mxu0 %v419
      %432 = vmatprep.subr.bf16.mxu0 0
      %433 = vmatpush1.bf16.msra.mxu0 %v420
      %434 = vmatprep.subr.bf16.mxu0 0
      %435 = vmatpush1.bf16.msra.mxu0 %v421
      %436 = vmatprep.subr.bf16.mxu0 0
      %437 = vmatpush1.bf16.msra.mxu0 %v422
      %438 = vmatprep.subr.bf16.mxu0 0
      %439 = vmatpush1.bf16.msra.mxu0 0
      %440 = vmatprep.subr.bf16.mxu0 0
      %441 = vmatpush1.bf16.msra.mxu0 0
      %442 = vmatprep.subr.bf16.mxu0 0
      %443 = vmatpush1.bf16.msra.mxu0 0
      %444 = vmatprep.subr.bf16.mxu0 0
      %445 = vmatpush1.bf16.msra.mxu0 0
      %446 = vmatprep.subr.bf16.mxu0 0
      %447 = vmatpush1.bf16.msra.mxu0 0
      %448 = vmatprep.subr.bf16.mxu0 0
      %449 = vmatpush1.bf16.msra.mxu0 0
      %450 = vmatprep.subr.bf16.mxu0 0
      %451 = vmatpush1.bf16.msra.mxu0 0
      %452 = vmatprep.subr.bf16.mxu0 0
      %453 = vmatpush1.bf16.msra.mxu0 0
      %454 = vmatprep.subr.bf16.mxu0 0
      %455 = vmatpush1.bf16.msra.mxu0 0
      %456 = vmatprep.subr.bf16.mxu0 0
      %457 = vmatpush1.bf16.msra.mxu0 0
      %458 = vmatprep.subr.bf16.mxu0 0
      %459 = vmatpush1.bf16.msra.mxu0 0
      %460 = vmatprep.subr.bf16.mxu0 0
      %461 = vmatpush1.bf16.msra.mxu0 0
      %462 = vmatprep.mubr.bf16.mxu0 0
      %463 = vmatmul.mubr.bf16.gmra.mrb[0].mxu0 %v428
      %v464 = vpop.f32.mrb[0].mxu0
      %v465 = vadd.f32 0.0, %v464
      %v466 = vpop.f32.mrb[0].mxu0
      %v467 = vpop.f32.mrb[0].mxu0
      %v468 = vadd.f32 0.0, %v467
      %v469 = vpop.f32.mrb[0].mxu0
      %470 = vdwg.mxu0
      %v471 = vadd.f32 %v385, %v465
      %v472 = vadd.f32 %v388, %v468
      %vm473 = vcmp.gt.f32.partialorder %v471, 0.0
      %vm474 = vcmp.gt.f32.partialorder %v472, 0.0
      %v475 = vmul.f32 %v471, 0.2
      %v476 = vmul.f32 %v472, 0.2
      %v477 = vsel %vm473, %v471, %v475
      %v478 = vsel %vm474, %v472, %v476
      %v479 = vpack.c.bf16 %v478, %v477
      %vm480 = vcmask 1047559
      %vm481 = vsmask.f32 7966
      %vm482 = vmand %vm480, %vm481
      %v483 = vld [vmem:[#allocation3] sm:$0x80]
      %v484 = vsel %vm482, 0, %v483
      %485 = vst [vmem:[#allocation3] sm:$0x80] %v484
      %vm486 = vcmask 1040384
      %vm487 = vsmask.f32 256
      %vm488 = vmand %vm486, %vm487
      %v489 = vld [vmem:[#allocation3 + $0x10] sm:$0x1]
      %v490 = vsel %vm488, 0, %v489
      %491 = vst [vmem:[#allocation3 + $0x10] sm:$0x1] %v490
      %492 = vst [vmem:[#allocation3 + $0x8] sm:$0xff] %v479
      %v493 = vld [vmem:[#allocation3] sm:$0x80]
      %v494 = vld [vmem:[#allocation3 + $0x8] sm:$0xff]
      %v495 = vld [vmem:[%s2] sm:$0xf]
      %v496 = vld [vmem:[%s2 + $0x4] sm:$0xf]
      %v497 = vld [vmem:[%s2 + $0x8] sm:$0xf]
      %v498 = vld [vmem:[%s2 + $0xc] sm:$0xf]
      %v499 = vld [vmem:[%s2 + $0x10] sm:$0xf]
      %v500 = vld [vmem:[%s2 + $0x14] sm:$0xf]
      %v501 = vld [vmem:[%s2 + $0x18] sm:$0xf]
      %v502 = vld [vmem:[%s2 + $0x1c] sm:$0xf]
      %v503 = vld [vmem:[%s2 + $0x20] sm:$0xf]
      %v504 = vld [vmem:[%s2 + $0x24] sm:$0xf]
      %v505 = vld [vmem:[%s2 + $0x28] sm:$0xf]
      %v506 = vld [vmem:[%s2 + $0x2c] sm:$0xf]
      %v507 = vld [vmem:[%s2 + $0x30] sm:$0xf]
      %v508 = vld [vmem:[%s2 + $0x34] sm:$0xf]
      %v509 = vld [vmem:[%s2 + $0x38] sm:$0xf]
      %v510 = vld [vmem:[%s2 + $0x3c] sm:$0xf]
      %s511 = scalar_lea.vmem %s2, 64
      %v512 = vld [vmem:[%s511] sm:$0xf]
      %v513 = vld [vmem:[%s511 + $0x4] sm:$0xf]
      %v514 = vld [vmem:[%s511 + $0x8] sm:$0xf]
      %v515 = vld [vmem:[%s511 + $0xc] sm:$0xf]
      %v516 = vld [vmem:[%s511 + $0x10] sm:$0xf]
      %v517 = vld [vmem:[%s511 + $0x14] sm:$0xf]
      %v518 = vld [vmem:[%s511 + $0x18] sm:$0xf]
      %v519 = vld [vmem:[%s511 + $0x1c] sm:$0xf]
      %v520 = vld [vmem:[%s511 + $0x20] sm:$0xf]
      %v521 = vld [vmem:[%s511 + $0x24] sm:$0xf]
      %v522 = vld [vmem:[%s511 + $0x28] sm:$0xf]
      %v523 = vld [vmem:[%s511 + $0x2c] sm:$0xf]
      %v524 = vld [vmem:[%s511 + $0x30] sm:$0xf]
      %v525 = vld [vmem:[%s511 + $0x34] sm:$0xf]
      %v526 = vld [vmem:[%s511 + $0x38] sm:$0xf]
      %v527 = vld [vmem:[%s511 + $0x3c] sm:$0xf]
      %v544 = vunpack.c.l.b16 %v512
      %v545 = vunpack.c.l.b16 %v513
      %v546 = vunpack.c.l.b16 %v514
      %v547 = vunpack.c.l.b16 %v515
      %v548 = vunpack.c.l.b16 %v516
      %v549 = vunpack.c.l.b16 %v517
      %v550 = vunpack.c.l.b16 %v518
      %v551 = vunpack.c.l.b16 %v519
      %v552 = vunpack.c.l.b16 %v520
      %v553 = vunpack.c.l.b16 %v521
      %v554 = vunpack.c.l.b16 %v522
      %v555 = vunpack.c.l.b16 %v523
      %v556 = vunpack.c.l.b16 %v524
      %v557 = vunpack.c.l.b16 %v525
      %v558 = vunpack.c.l.b16 %v526
      %v559 = vunpack.c.l.b16 %v527
      %v560 = vpack.c.b16 %v545, %v544
      %v561 = vpack.c.b16 %v547, %v546
      %v562 = vpack.c.b16 %v549, %v548
      %v563 = vpack.c.b16 %v551, %v550
      %v564 = vpack.c.b16 %v553, %v552
      %v565 = vpack.c.b16 %v555, %v554
      %v566 = vpack.c.b16 %v557, %v556
      %v567 = vpack.c.b16 %v559, %v558
      %576 = vmatprep.subr.bf16.mxu0 0
      %577 = vmatpush1.bf16.msra.mxu0 %v560
      %578 = vmatprep.subr.bf16.mxu0 0
      %579 = vmatpush1.bf16.msra.mxu0 %v561
      %580 = vmatprep.subr.bf16.mxu0 0
      %581 = vmatpush1.bf16.msra.mxu0 %v562
      %582 = vmatprep.subr.bf16.mxu0 0
      %583 = vmatpush1.bf16.msra.mxu0 %v563
      %584 = vmatprep.subr.bf16.mxu0 0
      %585 = vmatpush1.bf16.msra.mxu0 %v564
      %586 = vmatprep.subr.bf16.mxu0 0
      %587 = vmatpush1.bf16.msra.mxu0 %v565
      %588 = vmatprep.subr.bf16.mxu0 0
      %589 = vmatpush1.bf16.msra.mxu0 %v566
      %590 = vmatprep.subr.bf16.mxu0 0
      %591 = vmatpush1.bf16.msra.mxu0 %v567
      %592 = vmatprep.subr.bf16.mxu0 0
      %593 = vmatpush1.bf16.msra.mxu0 0
      %594 = vmatprep.subr.bf16.mxu0 0
      %595 = vmatpush1.bf16.msra.mxu0 0
      %596 = vmatprep.subr.bf16.mxu0 0
      %597 = vmatpush1.bf16.msra.mxu0 0
      %598 = vmatprep.subr.bf16.mxu0 0
      %599 = vmatpush1.bf16.msra.mxu0 0
      %600 = vmatprep.subr.bf16.mxu0 0
      %601 = vmatpush1.bf16.msra.mxu0 0
      %602 = vmatprep.subr.bf16.mxu0 0
      %603 = vmatpush1.bf16.msra.mxu0 0
      %604 = vmatprep.subr.bf16.mxu0 0
      %605 = vmatpush1.bf16.msra.mxu0 0
      %606 = vmatprep.subr.bf16.mxu0 0
      %607 = vmatpush1.bf16.msra.mxu0 0
      %608 = vmatprep.mubr.bf16.mxu0 0
      %609 = vmatmul.mubr.bf16.gmra.mrb[0].mxu0 %v494
      %v610 = vpop.f32.mrb[0].mxu0
      %v611 = vadd.f32 0.0, %v610
      %v612 = vpop.f32.mrb[0].mxu0
      %v613 = vpop.f32.mrb[0].mxu0
      %v614 = vadd.f32 0.0, %v613
      %v615 = vpop.f32.mrb[0].mxu0
      %616 = vdwg.mxu0
      %v618 = vshrl.u32 %v493, 16
      %v620 = vrot.slane %v618, 7
      %v622 = vshrl.u32 %v494, 16
      %v624 = vrot.slane %v622, 7
      %v625 = vshll.u32 %v494, 16
      %v627 = vor.u32 %v624, %v625
      %v628 = vsel %vm487, %v620, %v627
      %v646 = vunpack.c.l.b16 %v495
      %v647 = vunpack.c.l.b16 %v496
      %v648 = vunpack.c.l.b16 %v497
      %v649 = vunpack.c.l.b16 %v498
      %v650 = vunpack.c.l.b16 %v499
      %v651 = vunpack.c.l.b16 %v500
      %v652 = vunpack.c.l.b16 %v501
      %v653 = vunpack.c.l.b16 %v502
      %v654 = vunpack.c.l.b16 %v503
      %v655 = vunpack.c.l.b16 %v504
      %v656 = vunpack.c.l.b16 %v505
      %v657 = vunpack.c.l.b16 %v506
      %v658 = vunpack.c.l.b16 %v507
      %v659 = vunpack.c.l.b16 %v508
      %v660 = vunpack.c.l.b16 %v509
      %v661 = vunpack.c.l.b16 %v510
      %v662 = vpack.c.b16 %v647, %v646
      %v663 = vpack.c.b16 %v649, %v648
      %v664 = vpack.c.b16 %v651, %v650
      %v665 = vpack.c.b16 %v653, %v652
      %v666 = vpack.c.b16 %v655, %v654
      %v667 = vpack.c.b16 %v657, %v656
      %v668 = vpack.c.b16 %v659, %v658
      %v669 = vpack.c.b16 %v661, %v660
      %678 = vmatprep.subr.bf16.mxu0 0
      %679 = vmatpush1.bf16.msra.mxu0 %v662
      %680 = vmatprep.subr.bf16.mxu0 0
      %681 = vmatpush1.bf16.msra.mxu0 %v663
      %682 = vmatprep.subr.bf16.mxu0 0
      %683 = vmatpush1.bf16.msra.mxu0 %v664
      %684 = vmatprep.subr.bf16.mxu0 0
      %685 = vmatpush1.bf16.msra.mxu0 %v665
      %686 = vmatprep.subr.bf16.mxu0 0
      %687 = vmatpush1.bf16.msra.mxu0 %v666
      %688 = vmatprep.subr.bf16.mxu0 0
      %689 = vmatpush1.bf16.msra.mxu0 %v667
      %690 = vmatprep.subr.bf16.mxu0 0
      %691 = vmatpush1.bf16.msra.mxu0 %v668
      %692 = vmatprep.subr.bf16.mxu0 0
      %693 = vmatpush1.bf16.msra.mxu0 %v669
      %694 = vmatprep.subr.bf16.mxu0 0
      %695 = vmatpush1.bf16.msra.mxu0 0
      %696 = vmatprep.subr.bf16.mxu0 0
      %697 = vmatpush1.bf16.msra.mxu0 0
      %698 = vmatprep.subr.bf16.mxu0 0
      %699 = vmatpush1.bf16.msra.mxu0 0
      %700 = vmatprep.subr.bf16.mxu0 0
      %701 = vmatpush1.bf16.msra.mxu0 0
      %702 = vmatprep.subr.bf16.mxu0 0
      %703 = vmatpush1.bf16.msra.mxu0 0
      %704 = vmatprep.subr.bf16.mxu0 0
      %705 = vmatpush1.bf16.msra.mxu0 0
      %706 = vmatprep.subr.bf16.mxu0 0
      %707 = vmatpush1.bf16.msra.mxu0 0
      %708 = vmatprep.subr.bf16.mxu0 0
      %709 = vmatpush1.bf16.msra.mxu0 0
      %710 = vmatprep.mubr.bf16.mxu0 0
      %711 = vmatmul.mubr.bf16.gmra.mrb[0].mxu0 %v628
      %v712 = vpop.f32.mrb[0].mxu0
      %v713 = vadd.f32 %v611, %v712
      %v714 = vpop.f32.mrb[0].mxu0
      %v715 = vpop.f32.mrb[0].mxu0
      %v716 = vadd.f32 %v614, %v715
      %v717 = vpop.f32.mrb[0].mxu0
      %718 = vdwg.mxu0
      %v719 = vld [vmem:[#allocation3 + $0x8] sm:$0xff]
      %v720 = vld [vmem:[#allocation3 + $0x10] sm:$0x1]
      %s721 = scalar_lea.vmem %s2, 128
      %v722 = vld [vmem:[%s721] sm:$0xf]
      %v723 = vld [vmem:[%s721 + $0x4] sm:$0xf]
      %v724 = vld [vmem:[%s721 + $0x8] sm:$0xf]
      %v725 = vld [vmem:[%s721 + $0xc] sm:$0xf]
      %v726 = vld [vmem:[%s721 + $0x10] sm:$0xf]
      %v727 = vld [vmem:[%s721 + $0x14] sm:$0xf]
      %v728 = vld [vmem:[%s721 + $0x18] sm:$0xf]
      %v729 = vld [vmem:[%s721 + $0x1c] sm:$0xf]
      %v730 = vld [vmem:[%s721 + $0x20] sm:$0xf]
      %v731 = vld [vmem:[%s721 + $0x24] sm:$0xf]
      %v732 = vld [vmem:[%s721 + $0x28] sm:$0xf]
      %v733 = vld [vmem:[%s721 + $0x2c] sm:$0xf]
      %v734 = vld [vmem:[%s721 + $0x30] sm:$0xf]
      %v735 = vld [vmem:[%s721 + $0x34] sm:$0xf]
      %v736 = vld [vmem:[%s721 + $0x38] sm:$0xf]
      %v737 = vld [vmem:[%s721 + $0x3c] sm:$0xf]
      %vm738 = vsmask.f32 7424
      %v740 = vshrl.u32 %v719, 16
      %v742 = vshll.u32 %v719, 16
      %v744 = vrot.slane %v742, 1
      %v745 = vor.u32 %v740, %v744
      %v747 = vshll.u32 %v720, 16
      %v749 = vrot.slane %v747, 1
      %v750 = vsel %vm738, %v745, %v749
      %v768 = vunpack.c.l.b16 %v722
      %v769 = vunpack.c.l.b16 %v723
      %v770 = vunpack.c.l.b16 %v724
      %v771 = vunpack.c.l.b16 %v725
      %v772 = vunpack.c.l.b16 %v726
      %v773 = vunpack.c.l.b16 %v727
      %v774 = vunpack.c.l.b16 %v728
      %v775 = vunpack.c.l.b16 %v729
      %v776 = vunpack.c.l.b16 %v730
      %v777 = vunpack.c.l.b16 %v731
      %v778 = vunpack.c.l.b16 %v732
      %v779 = vunpack.c.l.b16 %v733
      %v780 = vunpack.c.l.b16 %v734
      %v781 = vunpack.c.l.b16 %v735
      %v782 = vunpack.c.l.b16 %v736
      %v783 = vunpack.c.l.b16 %v737
      %v784 = vpack.c.b16 %v769, %v768
      %v785 = vpack.c.b16 %v771, %v770
      %v786 = vpack.c.b16 %v773, %v772
      %v787 = vpack.c.b16 %v775, %v774
      %v788 = vpack.c.b16 %v777, %v776
      %v789 = vpack.c.b16 %v779, %v778
      %v790 = vpack.c.b16 %v781, %v780
      %v791 = vpack.c.b16 %v783, %v782
      %800 = vmatprep.subr.bf16.mxu0 0
      %801 = vmatpush1.bf16.msra.mxu0 %v784
      %802 = vmatprep.subr.bf16.mxu0 0
      %803 = vmatpush1.bf16.msra.mxu0 %v785
      %804 = vmatprep.subr.bf16.mxu0 0
      %805 = vmatpush1.bf16.msra.mxu0 %v786
      %806 = vmatprep.subr.bf16.mxu0 0
      %807 = vmatpush1.bf16.msra.mxu0 %v787
      %808 = vmatprep.subr.bf16.mxu0 0
      %809 = vmatpush1.bf16.msra.mxu0 %v788
      %810 = vmatprep.subr.bf16.mxu0 0
      %811 = vmatpush1.bf16.msra.mxu0 %v789
      %812 = vmatprep.subr.bf16.mxu0 0
      %813 = vmatpush1.bf16.msra.mxu0 %v790
      %814 = vmatprep.subr.bf16.mxu0 0
      %815 = vmatpush1.bf16.msra.mxu0 %v791
      %816 = vmatprep.subr.bf16.mxu0 0
      %817 = vmatpush1.bf16.msra.mxu0 0
      %818 = vmatprep.subr.bf16.mxu0 0
      %819 = vmatpush1.bf16.msra.mxu0 0
      %820 = vmatprep.subr.bf16.mxu0 0
      %821 = vmatpush1.bf16.msra.mxu0 0
      %822 = vmatprep.subr.bf16.mxu0 0
      %823 = vmatpush1.bf16.msra.mxu0 0
      %824 = vmatprep.subr.bf16.mxu0 0
      %825 = vmatpush1.bf16.msra.mxu0 0
      %826 = vmatprep.subr.bf16.mxu0 0
      %827 = vmatpush1.bf16.msra.mxu0 0
      %828 = vmatprep.subr.bf16.mxu0 0
      %829 = vmatpush1.bf16.msra.mxu0 0
      %830 = vmatprep.subr.bf16.mxu0 0
      %831 = vmatpush1.bf16.msra.mxu0 0
      %832 = vmatprep.mubr.bf16.mxu0 0
      %833 = vmatmul.mubr.bf16.gmra.mrb[0].mxu0 %v750
      %v834 = vpop.f32.mrb[0].mxu0
      %v835 = vadd.f32 0.0, %v834
      %v836 = vpop.f32.mrb[0].mxu0
      %v837 = vpop.f32.mrb[0].mxu0
      %v838 = vadd.f32 0.0, %v837
      %v839 = vpop.f32.mrb[0].mxu0
      %840 = vdwg.mxu0
      %v841 = vadd.f32 %v713, %v835
      %v842 = vadd.f32 %v716, %v838
      %vm843 = vcmp.gt.f32.partialorder %v841, 0.0
      %vm844 = vcmp.gt.f32.partialorder %v842, 0.0
      %v845 = vmul.f32 %v841, 0.2
      %v846 = vmul.f32 %v842, 0.2
      %v847 = vsel %vm843, %v841, %v845
      %v848 = vsel %vm844, %v842, %v846
      %849 = vst [vmem:[#allocation4 + $0xf] sm:$0x1] 0.0
      %850 = vst [vmem:[#allocation4 + $0x20] sm:$0x1] 0.0
      %851 = vst [vmem:[#allocation4 + $0x10] sm:$0xff] %v847
      %852 = vst [vmem:[#allocation4 + $0x18] sm:$0xff] %v848
      %s853 = scalar_lea.vmem [#allocation4], 15
      %v854 = vld [vmem:[%s853] ss:$2 sm:$0xff]
      %v855 = vpack.c.bf16 %v854, %v854
      %v856 = vld [vmem:[%s3] sm:$0xf]
      %v857 = vld [vmem:[%s3 + $0x4] sm:$0xf]
      %v858 = vld [vmem:[%s3 + $0x8] sm:$0xf]
      %v859 = vld [vmem:[%s3 + $0xc] sm:$0xf]
      %v860 = vld [vmem:[%s3 + $0x10] sm:$0xf]
      %v861 = vld [vmem:[%s3 + $0x14] sm:$0xf]
      %v862 = vld [vmem:[%s3 + $0x18] sm:$0xf]
      %v863 = vld [vmem:[%s3 + $0x1c] sm:$0xf]
      %v864 = vld [vmem:[%s3 + $0x20] sm:$0xf]
      %v865 = vld [vmem:[%s3 + $0x24] sm:$0xf]
      %v866 = vld [vmem:[%s3 + $0x28] sm:$0xf]
      %v867 = vld [vmem:[%s3 + $0x2c] sm:$0xf]
      %v868 = vld [vmem:[%s3 + $0x30] sm:$0xf]
      %v869 = vld [vmem:[%s3 + $0x34] sm:$0xf]
      %v870 = vld [vmem:[%s3 + $0x38] sm:$0xf]
      %v871 = vld [vmem:[%s3 + $0x3c] sm:$0xf]
      %s872 = scalar_lea.vmem [#allocation4], 16
      %v873 = vld [vmem:[%s872] ss:$2 sm:$0xff]
      %v874 = vpack.c.bf16 %v873, %v873
      %s875 = scalar_lea.vmem %s3, 64
      %v876 = vld [vmem:[%s875] sm:$0xf]
      %v877 = vld [vmem:[%s875 + $0x4] sm:$0xf]
      %v878 = vld [vmem:[%s875 + $0x8] sm:$0xf]
      %v879 = vld [vmem:[%s875 + $0xc] sm:$0xf]
      %v880 = vld [vmem:[%s875 + $0x10] sm:$0xf]
      %v881 = vld [vmem:[%s875 + $0x14] sm:$0xf]
      %v882 = vld [vmem:[%s875 + $0x18] sm:$0xf]
      %v883 = vld [vmem:[%s875 + $0x1c] sm:$0xf]
      %v884 = vld [vmem:[%s875 + $0x20] sm:$0xf]
      %v885 = vld [vmem:[%s875 + $0x24] sm:$0xf]
      %v886 = vld [vmem:[%s875 + $0x28] sm:$0xf]
      %v887 = vld [vmem:[%s875 + $0x2c] sm:$0xf]
      %v888 = vld [vmem:[%s875 + $0x30] sm:$0xf]
      %v889 = vld [vmem:[%s875 + $0x34] sm:$0xf]
      %v890 = vld [vmem:[%s875 + $0x38] sm:$0xf]
      %v891 = vld [vmem:[%s875 + $0x3c] sm:$0xf]
      %v908 = vunpack.c.l.b16 %v876
      %v909 = vunpack.c.l.b16 %v877
      %v910 = vunpack.c.l.b16 %v878
      %v911 = vunpack.c.l.b16 %v879
      %v912 = vunpack.c.l.b16 %v880
      %v913 = vunpack.c.l.b16 %v881
      %v914 = vunpack.c.l.b16 %v882
      %v915 = vunpack.c.l.b16 %v883
      %v916 = vunpack.c.l.b16 %v884
      %v917 = vunpack.c.l.b16 %v885
      %v918 = vunpack.c.l.b16 %v886
      %v919 = vunpack.c.l.b16 %v887
      %v920 = vunpack.c.l.b16 %v888
      %v921 = vunpack.c.l.b16 %v889
      %v922 = vunpack.c.l.b16 %v890
      %v923 = vunpack.c.l.b16 %v891
      %v924 = vpack.c.b16 %v909, %v908
      %v925 = vpack.c.b16 %v911, %v910
      %v926 = vpack.c.b16 %v913, %v912
      %v927 = vpack.c.b16 %v915, %v914
      %v928 = vpack.c.b16 %v917, %v916
      %v929 = vpack.c.b16 %v919, %v918
      %v930 = vpack.c.b16 %v921, %v920
      %v931 = vpack.c.b16 %v923, %v922
      %940 = vmatprep.subr.bf16.mxu0 0
      %941 = vmatpush1.bf16.msra.mxu0 %v924
      %942 = vmatprep.subr.bf16.mxu0 0
      %943 = vmatpush1.bf16.msra.mxu0 %v925
      %944 = vmatprep.subr.bf16.mxu0 0
      %945 = vmatpush1.bf16.msra.mxu0 %v926
      %946 = vmatprep.subr.bf16.mxu0 0
      %947 = vmatpush1.bf16.msra.mxu0 %v927
      %948 = vmatprep.subr.bf16.mxu0 0
      %949 = vmatpush1.bf16.msra.mxu0 %v928
      %950 = vmatprep.subr.bf16.mxu0 0
      %951 = vmatpush1.bf16.msra.mxu0 %v929
      %952 = vmatprep.subr.bf16.mxu0 0
      %953 = vmatpush1.bf16.msra.mxu0 %v930
      %954 = vmatprep.subr.bf16.mxu0 0
      %955 = vmatpush1.bf16.msra.mxu0 %v931
      %956 = vmatprep.subr.bf16.mxu0 0
      %957 = vmatpush1.bf16.msra.mxu0 0
      %958 = vmatprep.subr.bf16.mxu0 0
      %959 = vmatpush1.bf16.msra.mxu0 0
      %960 = vmatprep.subr.bf16.mxu0 0
      %961 = vmatpush1.bf16.msra.mxu0 0
      %962 = vmatprep.subr.bf16.mxu0 0
      %963 = vmatpush1.bf16.msra.mxu0 0
      %964 = vmatprep.subr.bf16.mxu0 0
      %965 = vmatpush1.bf16.msra.mxu0 0
      %966 = vmatprep.subr.bf16.mxu0 0
      %967 = vmatpush1.bf16.msra.mxu0 0
      %968 = vmatprep.subr.bf16.mxu0 0
      %969 = vmatpush1.bf16.msra.mxu0 0
      %970 = vmatprep.subr.bf16.mxu0 0
      %971 = vmatpush1.bf16.msra.mxu0 0
      %972 = vmatprep.mubr.bf16.mxu0 0
      %973 = vmatmul.mubr.bf16.gmra.mrb[0].mxu0 %v874
      %v974 = vpop.f32.mrb[0].mxu0
      %v975 = vadd.f32 0.0, %v974
      %v976 = vpop.f32.mrb[0].mxu0
      %v977 = vpop.f32.mrb[0].mxu0
      %v978 = vpop.f32.mrb[0].mxu0
      %979 = vdwg.mxu0
      %v996 = vunpack.c.l.b16 %v856
      %v997 = vunpack.c.l.b16 %v857
      %v998 = vunpack.c.l.b16 %v858
      %v999 = vunpack.c.l.b16 %v859
      %v1000 = vunpack.c.l.b16 %v860
      %v1001 = vunpack.c.l.b16 %v861
      %v1002 = vunpack.c.l.b16 %v862
      %v1003 = vunpack.c.l.b16 %v863
      %v1004 = vunpack.c.l.b16 %v864
      %v1005 = vunpack.c.l.b16 %v865
      %v1006 = vunpack.c.l.b16 %v866
      %v1007 = vunpack.c.l.b16 %v867
      %v1008 = vunpack.c.l.b16 %v868
      %v1009 = vunpack.c.l.b16 %v869
      %v1010 = vunpack.c.l.b16 %v870
      %v1011 = vunpack.c.l.b16 %v871
      %v1012 = vpack.c.b16 %v997, %v996
      %v1013 = vpack.c.b16 %v999, %v998
      %v1014 = vpack.c.b16 %v1001, %v1000
      %v1015 = vpack.c.b16 %v1003, %v1002
      %v1016 = vpack.c.b16 %v1005, %v1004
      %v1017 = vpack.c.b16 %v1007, %v1006
      %v1018 = vpack.c.b16 %v1009, %v1008
      %v1019 = vpack.c.b16 %v1011, %v1010
      %1028 = vmatprep.subr.bf16.mxu0 0
      %1029 = vmatpush1.bf16.msra.mxu0 %v1012
      %1030 = vmatprep.subr.bf16.mxu0 0
      %1031 = vmatpush1.bf16.msra.mxu0 %v1013
      %1032 = vmatprep.subr.bf16.mxu0 0
      %1033 = vmatpush1.bf16.msra.mxu0 %v1014
      %1034 = vmatprep.subr.bf16.mxu0 0
      %1035 = vmatpush1.bf16.msra.mxu0 %v1015
      %1036 = vmatprep.subr.bf16.mxu0 0
      %1037 = vmatpush1.bf16.msra.mxu0 %v1016
      %1038 = vmatprep.subr.bf16.mxu0 0
      %1039 = vmatpush1.bf16.msra.mxu0 %v1017
      %1040 = vmatprep.subr.bf16.mxu0 0
      %1041 = vmatpush1.bf16.msra.mxu0 %v1018
      %1042 = vmatprep.subr.bf16.mxu0 0
      %1043 = vmatpush1.bf16.msra.mxu0 %v1019
      %1044 = vmatprep.subr.bf16.mxu0 0
      %1045 = vmatpush1.bf16.msra.mxu0 0
      %1046 = vmatprep.subr.bf16.mxu0 0
      %1047 = vmatpush1.bf16.msra.mxu0 0
      %1048 = vmatprep.subr.bf16.mxu0 0
      %1049 = vmatpush1.bf16.msra.mxu0 0
      %1050 = vmatprep.subr.bf16.mxu0 0
      %1051 = vmatpush1.bf16.msra.mxu0 0
      %1052 = vmatprep.subr.bf16.mxu0 0
      %1053 = vmatpush1.bf16.msra.mxu0 0
      %1054 = vmatprep.subr.bf16.mxu0 0
      %1055 = vmatpush1.bf16.msra.mxu0 0
      %1056 = vmatprep.subr.bf16.mxu0 0
      %1057 = vmatpush1.bf16.msra.mxu0 0
      %1058 = vmatprep.subr.bf16.mxu0 0
      %1059 = vmatpush1.bf16.msra.mxu0 0
      %1060 = vmatprep.mubr.bf16.mxu0 0
      %1061 = vmatmul.mubr.bf16.gmra.mrb[0].mxu0 %v855
      %v1062 = vpop.f32.mrb[0].mxu0
      %v1063 = vadd.f32 %v975, %v1062
      %v1064 = vpop.f32.mrb[0].mxu0
      %v1065 = vpop.f32.mrb[0].mxu0
      %v1066 = vpop.f32.mrb[0].mxu0
      %1067 = vdwg.mxu0
      %s1068 = scalar_lea.vmem [#allocation4], 17
      %v1069 = vld [vmem:[%s1068] ss:$2 sm:$0xff]
      %v1070 = vpack.c.bf16 %v1069, %v1069
      %s1071 = scalar_lea.vmem %s3, 128
      %v1072 = vld [vmem:[%s1071] sm:$0xf]
      %v1073 = vld [vmem:[%s1071 + $0x4] sm:$0xf]
      %v1074 = vld [vmem:[%s1071 + $0x8] sm:$0xf]
      %v1075 = vld [vmem:[%s1071 + $0xc] sm:$0xf]
      %v1076 = vld [vmem:[%s1071 + $0x10] sm:$0xf]
      %v1077 = vld [vmem:[%s1071 + $0x14] sm:$0xf]
      %v1078 = vld [vmem:[%s1071 + $0x18] sm:$0xf]
      %v1079 = vld [vmem:[%s1071 + $0x1c] sm:$0xf]
      %v1080 = vld [vmem:[%s1071 + $0x20] sm:$0xf]
      %v1081 = vld [vmem:[%s1071 + $0x24] sm:$0xf]
      %v1082 = vld [vmem:[%s1071 + $0x28] sm:$0xf]
      %v1083 = vld [vmem:[%s1071 + $0x2c] sm:$0xf]
      %v1084 = vld [vmem:[%s1071 + $0x30] sm:$0xf]
      %v1085 = vld [vmem:[%s1071 + $0x34] sm:$0xf]
      %v1086 = vld [vmem:[%s1071 + $0x38] sm:$0xf]
      %v1087 = vld [vmem:[%s1071 + $0x3c] sm:$0xf]
      %v1104 = vunpack.c.l.b16 %v1072
      %v1105 = vunpack.c.l.b16 %v1073
      %v1106 = vunpack.c.l.b16 %v1074
      %v1107 = vunpack.c.l.b16 %v1075
      %v1108 = vunpack.c.l.b16 %v1076
      %v1109 = vunpack.c.l.b16 %v1077
      %v1110 = vunpack.c.l.b16 %v1078
      %v1111 = vunpack.c.l.b16 %v1079
      %v1112 = vunpack.c.l.b16 %v1080
      %v1113 = vunpack.c.l.b16 %v1081
      %v1114 = vunpack.c.l.b16 %v1082
      %v1115 = vunpack.c.l.b16 %v1083
      %v1116 = vunpack.c.l.b16 %v1084
      %v1117 = vunpack.c.l.b16 %v1085
      %v1118 = vunpack.c.l.b16 %v1086
      %v1119 = vunpack.c.l.b16 %v1087
      %v1120 = vpack.c.b16 %v1105, %v1104
      %v1121 = vpack.c.b16 %v1107, %v1106
      %v1122 = vpack.c.b16 %v1109, %v1108
      %v1123 = vpack.c.b16 %v1111, %v1110
      %v1124 = vpack.c.b16 %v1113, %v1112
      %v1125 = vpack.c.b16 %v1115, %v1114
      %v1126 = vpack.c.b16 %v1117, %v1116
      %v1127 = vpack.c.b16 %v1119, %v1118
      %1136 = vmatprep.subr.bf16.mxu0 0
      %1137 = vmatpush1.bf16.msra.mxu0 %v1120
      %1138 = vmatprep.subr.bf16.mxu0 0
      %1139 = vmatpush1.bf16.msra.mxu0 %v1121
      %1140 = vmatprep.subr.bf16.mxu0 0
      %1141 = vmatpush1.bf16.msra.mxu0 %v1122
      %1142 = vmatprep.subr.bf16.mxu0 0
      %1143 = vmatpush1.bf16.msra.mxu0 %v1123
      %1144 = vmatprep.subr.bf16.mxu0 0
      %1145 = vmatpush1.bf16.msra.mxu0 %v1124
      %1146 = vmatprep.subr.bf16.mxu0 0
      %1147 = vmatpush1.bf16.msra.mxu0 %v1125
      %1148 = vmatprep.subr.bf16.mxu0 0
      %1149 = vmatpush1.bf16.msra.mxu0 %v1126
      %1150 = vmatprep.subr.bf16.mxu0 0
      %1151 = vmatpush1.bf16.msra.mxu0 %v1127
      %1152 = vmatprep.subr.bf16.mxu0 0
      %1153 = vmatpush1.bf16.msra.mxu0 0
      %1154 = vmatprep.subr.bf16.mxu0 0
      %1155 = vmatpush1.bf16.msra.mxu0 0
      %1156 = vmatprep.subr.bf16.mxu0 0
      %1157 = vmatpush1.bf16.msra.mxu0 0
      %1158 = vmatprep.subr.bf16.mxu0 0
      %1159 = vmatpush1.bf16.msra.mxu0 0
      %1160 = vmatprep.subr.bf16.mxu0 0
      %1161 = vmatpush1.bf16.msra.mxu0 0
      %1162 = vmatprep.subr.bf16.mxu0 0
      %1163 = vmatpush1.bf16.msra.mxu0 0
      %1164 = vmatprep.subr.bf16.mxu0 0
      %1165 = vmatpush1.bf16.msra.mxu0 0
      %1166 = vmatprep.subr.bf16.mxu0 0
      %1167 = vmatpush1.bf16.msra.mxu0 0
      %1168 = vmatprep.mubr.bf16.mxu0 0
      %1169 = vmatmul.mubr.bf16.gmra.mrb[0].mxu0 %v1070
      %v1170 = vpop.f32.mrb[0].mxu0
      %v1171 = vadd.f32 0.0, %v1170
      %v1172 = vpop.f32.mrb[0].mxu0
      %v1173 = vpop.f32.mrb[0].mxu0
      %v1174 = vpop.f32.mrb[0].mxu0
      %1175 = vdwg.mxu0
      %v1176 = vadd.f32 %v1063, %v1171
      %s1177 = scalar_lea.vmem [#allocation2], 16
      %v1178 = vld [vmem:[%s1177] ss:$2 sm:$0xff]
      %v1179 = vpack.c.bf16 %v1178, %v1178
      %v1180 = vld [vmem:[%s4] sm:$0xf]
      %v1181 = vld [vmem:[%s4 + $0x4] sm:$0xf]
      %v1182 = vld [vmem:[%s4 + $0x8] sm:$0xf]
      %v1183 = vld [vmem:[%s4 + $0xc] sm:$0xf]
      %v1184 = vld [vmem:[%s4 + $0x10] sm:$0xf]
      %v1185 = vld [vmem:[%s4 + $0x14] sm:$0xf]
      %v1186 = vld [vmem:[%s4 + $0x18] sm:$0xf]
      %v1187 = vld [vmem:[%s4 + $0x1c] sm:$0xf]
      %v1196 = vunpack.c.l.b16 %v1180
      %v1197 = vunpack.c.l.b16 %v1181
      %v1198 = vunpack.c.l.b16 %v1182
      %v1199 = vunpack.c.l.b16 %v1183
      %v1200 = vunpack.c.l.b16 %v1184
      %v1201 = vunpack.c.l.b16 %v1185
      %v1202 = vunpack.c.l.b16 %v1186
      %v1203 = vunpack.c.l.b16 %v1187
      %v1204 = vpack.c.b16 %v1197, %v1196
      %v1205 = vpack.c.b16 %v1199, %v1198
      %v1206 = vpack.c.b16 %v1201, %v1200
      %v1207 = vpack.c.b16 %v1203, %v1202
      %v1213 = vsel %vm229, %v1179, 0
      %1215 = vmatprep.subr.bf16.mxu0 0
      %1216 = vmatpush1.bf16.msra.mxu0 %v1204
      %1217 = vmatprep.subr.bf16.mxu0 0
      %1218 = vmatpush1.bf16.msra.mxu0 %v1205
      %1219 = vmatprep.subr.bf16.mxu0 0
      %1220 = vmatpush1.bf16.msra.mxu0 %v1206
      %1221 = vmatprep.subr.bf16.mxu0 0
      %1222 = vmatpush1.bf16.msra.mxu0 %v1207
      %1223 = vmatprep.subr.bf16.mxu0 0
      %1224 = vmatpush1.bf16.msra.mxu0 0
      %1225 = vmatprep.subr.bf16.mxu0 0
      %1226 = vmatpush1.bf16.msra.mxu0 0
      %1227 = vmatprep.subr.bf16.mxu0 0
      %1228 = vmatpush1.bf16.msra.mxu0 0
      %1229 = vmatprep.subr.bf16.mxu0 0
      %1230 = vmatpush1.bf16.msra.mxu0 0
      %1231 = vmatprep.subr.bf16.mxu0 0
      %1232 = vmatpush1.bf16.msra.mxu0 0
      %1233 = vmatprep.subr.bf16.mxu0 0
      %1234 = vmatpush1.bf16.msra.mxu0 0
      %1235 = vmatprep.subr.bf16.mxu0 0
      %1236 = vmatpush1.bf16.msra.mxu0 0
      %1237 = vmatprep.subr.bf16.mxu0 0
      %1238 = vmatpush1.bf16.msra.mxu0 0
      %1239 = vmatprep.subr.bf16.mxu0 0
      %1240 = vmatpush1.bf16.msra.mxu0 0
      %1241 = vmatprep.subr.bf16.mxu0 0
      %1242 = vmatpush1.bf16.msra.mxu0 0
      %1243 = vmatprep.subr.bf16.mxu0 0
      %1244 = vmatpush1.bf16.msra.mxu0 0
      %1245 = vmatprep.subr.bf16.mxu0 0
      %1246 = vmatpush1.bf16.msra.mxu0 0
      %1247 = vmatprep.mubr.bf16.mxu0 0
      %1248 = vmatmul.mubr.bf16.gmra.mrb[0].mxu0 %v1213
      %v1249 = vpop.f32.mrb[0].mxu0
      %v1250 = vadd.f32 0.0, %v1249
      %v1251 = vpop.f32.mrb[0].mxu0
      %v1252 = vpop.f32.mrb[0].mxu0
      %v1253 = vpop.f32.mrb[0].mxu0
      %1254 = vdwg.mxu0
      %v1255 = vadd.f32 %v1176, %v1250
      %1256 = vst.msk [vmem:[%s222] sm:$0xff] %vm229, %v1255
      %p1257 = scmp.lt.s32.totalorder %s16, 1
      %s1258 = scalar_select %p1257, %s16, 1
      %s1259 = smul.addr %s1258, 8
      %s1260 = scalar_lea.vmem %s5, %s1259
      // Predicated region
      $region41: #{resblock_discriminator_gp.1} parent=39 // pred_check
        %p1261 = pneg %p144
      $region42: #{resblock_discriminator_gp.1} parent=39 // pred_check_branch
        %1263 = sbr.rel (%p1261) target = $region44
      $region43: #{resblock_discriminator_gp.1} parent=39 // pred_region
        _
      $region44: #{resblock_discriminator_gp.1} parent=39 // pred_fallthru
        _
    $region40: #{resblock_discriminator_gp.1} parent=5 // pred_fallthru
      _
    %p1264 = scmp.le.s32.totalorder 2, %s11
    // Predicated region
    $region45: #{resblock_discriminator_gp.1} parent=5 // pred_check
      %p1265 = pneg %p1264
    $region46: #{resblock_discriminator_gp.1} parent=5 // pred_check_branch
      %1267 = sbr.rel (%p1265) target = $region48
    $region47: #{resblock_discriminator_gp.1} parent=5 // pred_region
      %s1268 = ssub.s32 %s11, 2
      // Predicated region
      $region49: #{resblock_discriminator_gp.1} parent=47 // pred_check
        %p1269 = pneg %p150
      $region50: #{resblock_discriminator_gp.1} parent=47 // pred_check_branch
        %1271 = sbr.rel (%p1269) target = $region52
      $region51: #{resblock_discriminator_gp.1} parent=47 // pred_region
        %p1272 = scmp.lt.s32.totalorder %s17, 1
        %s1273 = scalar_select %p1272, %s17, 1
        %s1274 = smul.addr %s1273, 8
        %s1275 = scalar_lea.vmem %s5, %s1274
      $region52: #{resblock_discriminator_gp.1} parent=47 // pred_fallthru
        _
    $region48: #{resblock_discriminator_gp.1} parent=5 // pred_fallthru
      _
  $region6: #{resblock_discriminator_gp.1} parent=0 // loop_footer
    %s15 = sadd.s32 1, %s11
  $region7: #{resblock_discriminator_gp.1} parent=0 // loop_footer_branch
    %10 = sbr.rel target = $region3
  $region8: #{resblock_discriminator_gp.1} parent=0 // loop_exit
    _

</llo_original>
